<compile_context>
chip_gen: v7x
topology: tpu7x:2x2x1
jax: 0.10.0
libtpu: 0.0.40
codegen_flags: <defaults>
</compile_context>

<pallas_src>
import numpy as np
import jax
import jax.numpy as jnp
from jax.experimental import pallas as pl
from jax.experimental.pallas import tpu as pltpu

# ---- FCELoss "module parameters" (deterministic, set in-script) -------------
FOURIER_DEGREE = 2                 # k_max
NUM_SAMPLE = 16                    # number of polygon sample points
OHEM_RATIO = 3.0
K = 2 * FOURIER_DEGREE + 1         # 2k+1 Fourier coefficients per axis (=5)
NREG = 2 * K                       # regression channels (=10)
NGT = 2 * K + 3                    # gt channels (=13)
NPART = 8                          # number of per-tile partial sums
MAX_TILE = 4096                    # pixels (lanes) per grid step


def _fused_transform_matrix():
    """(2*NS, 2K) matrix Mt such that [ft_x; ft_y] = Mt @ [real; imag]."""
    k_vect = np.arange(-FOURIER_DEGREE, FOURIER_DEGREE + 1,
                       dtype=np.float32).reshape(-1, 1)
    i_vect = np.arange(0, NUM_SAMPLE, dtype=np.float32).reshape(1, -1)
    tm = (2.0 * np.pi / NUM_SAMPLE) * (k_vect @ i_vect)      # (K, NS)
    cos = np.cos(tm).astype(np.float32)
    sin = np.sin(tm).astype(np.float32)
    top = np.concatenate([cos.T, -sin.T], axis=1)            # x rows: (NS, 2K)
    bot = np.concatenate([sin.T, cos.T], axis=1)             # y rows: (NS, 2K)
    return jnp.asarray(np.concatenate([top, bot], axis=0))   # (2NS, 2K)


# ------------------------------ Pallas kernel --------------------------------
def _make_fce_kernel(hw, tile):
    """Kernel factory: hw / tile are static ints (closure)."""
    need_mask = (hw % tile) != 0

    def kernel(cls_ref, reg_ref, gt_ref, mt_ref, negce_ref, part_ref):
        # cls_ref: (1, 4, T)   [tr logits(2), tcl logits(2)]       pixels on lanes
        # reg_ref: (1, 10, T)  [x_pred(5), y_pred(5)]
        # gt_ref:  (1, 13, T)  [tr, tcl, train, x_map(5), y_map(5)]
        # mt_ref:  (32, 10)    fused fourier->poly matrix
        # negce_ref: (1, 1, T) per-pixel negative CE (for OHEM sort)
        # part_ref:  (1, 1, 8, 128) per-tile partial sums (lane 0 used)
        cls = cls_ref[0]                       # (4, T)
        reg = reg_ref[0]                       # (10, T)
        gt = gt_ref[0]                         # (13, T)
        mt = mt_ref[...]                       # (32, 10)

        if need_mask:
            lane = jax.lax.broadcasted_iota(jnp.int32, (1, tile), 1)
            pix = pl.program_id(1) * tile + lane
            valid = pix < hw                   # (1, T)
            cls = jnp.where(valid, cls, 0.0)
            reg = jnp.where(valid, reg, 0.0)
            gt = jnp.where(valid, gt, 0.0)
            valid_f = valid.astype(jnp.float32)
        else:
            valid_f = jnp.ones((1, tile), jnp.float32)

        tr = gt[0:1]                           # (1, T)
        tcl = gt[1:2]
        train = gt[2:3]

        def ce2(l0, l1, tgt):
            # 2-class cross entropy, target in {0,1} stored as float.
            m = jnp.maximum(l0, l1)
            lse = m + jnp.log(jnp.exp(l0 - m) + jnp.exp(l1 - m))
            sel = jnp.where(tgt > 0.5, l1, l0)
            return lse - sel                   # (1, T)

        ce_tr = ce2(cls[0:1], cls[1:2], tr)
        ce_tcl = ce2(cls[2:3], cls[3:4], tcl)

        # Delta trick: smooth_l1(ft_pred - ft_gt) == smooth_l1(fourier2poly(delta)).
        d = reg - gt[3:3 + NREG]               # (10, T)
        ft = jnp.dot(mt, d, preferred_element_type=jnp.float32)   # (32, T)
        a = jnp.abs(ft)
        sl = jnp.where(a < 1.0, 0.5 * ft * ft, a - 0.5)
        sx = jnp.sum(sl[0:NUM_SAMPLE], axis=0, keepdims=True)                  # (1, T)
        sy = jnp.sum(sl[NUM_SAMPLE:2 * NUM_SAMPLE], axis=0, keepdims=True)     # (1, T)
        weight = (tr + tcl) * 0.5
        rx = weight * sx
        ry = weight * sy

        pos = tr * train                       # == tr_train_mask
        neg = (1.0 - tr) * train

        # Per-pixel output: negative CE values (zeros elsewhere), lane-dense.
        negce_ref[0, :, :] = neg * ce_tr

        # Per-tile partial sums.
        q = jnp.concatenate([
            pos,                               # 0: n_pos (== n_tt)
            pos * ce_tr,                       # 1: sum of positive tr CE
            neg,                               # 2: n_neg count
            pos * ce_tcl,                      # 3: sum tcl CE over tr_train_mask
            (valid_f - pos) * ce_tcl,          # 4: sum tcl CE over 1 - tr_train_mask
            valid_f,                           # 5: n_valid pixels
            pos * rx,                          # 6: sum weighted smooth-L1 (x)
            pos * ry,                          # 7: sum weighted smooth-L1 (y)
        ], axis=0)                             # (8, T)
        sums = jnp.sum(q, axis=1, keepdims=True)              # (8, 1)
        part_ref[0, 0, :, :] = jnp.broadcast_to(sums, (NPART, 128))

    return kernel


def _run_level_kernel(cls_f, reg_f, gt_f, mt):
    N, _, HW = cls_f.shape
    if HW <= MAX_TILE:
        tile = HW                  # full pixel axis in one block (always legal)
        nb = 1
    else:
        tile = MAX_TILE            # multiple of 128; last block masked in-kernel
        nb = pl.cdiv(HW, MAX_TILE)

    kernel = _make_fce_kernel(HW, tile)
    negce, partials = pl.pallas_call(
        kernel,
        out_shape=(
            jax.ShapeDtypeStruct((N, 1, HW), jnp.float32),
            jax.ShapeDtypeStruct((N, nb, NPART, 128), jnp.float32),
        ),
        grid=(N, nb),
        in_specs=[
            pl.BlockSpec((1, 4, tile), lambda n, b: (n, 0, b)),
            pl.BlockSpec((1, NREG, tile), lambda n, b: (n, 0, b)),
            pl.BlockSpec((1, NGT, tile), lambda n, b: (n, 0, b)),
            pl.BlockSpec((2 * NUM_SAMPLE, NREG), lambda n, b: (0, 0)),
        ],
        out_specs=(
            pl.BlockSpec((1, 1, tile), lambda n, b: (n, 0, b)),
            pl.BlockSpec((1, 1, NPART, 128), lambda n, b: (n, b, 0, 0)),
        ),
        compiler_params=pltpu.CompilerParams(
            dimension_semantics=("parallel", "parallel")),
    )(cls_f, reg_f, gt_f, mt)
    return negce, partials


# ------------------------------ plain-JAX glue --------------------------------
def _forward_single(cls_p, reg_p, gt, mt):
    N, _, H, W = cls_p.shape
    HW = H * W
    # Free reshapes (NCHW stays channel-major); NO transpose copy.
    cls_f = cls_p.reshape(N, 4, HW)
    reg_f = reg_p.reshape(N, NREG, HW)
    gt_f = gt.reshape(N, NGT, HW)

    negce, partials = _run_level_kernel(cls_f, reg_f, gt_f, mt)
    sums = jnp.sum(partials[:, :, :, 0], axis=(0, 1))          # (8,)
    n_pos = sums[0]
    loss_pos_sum = sums[1]
    n_neg_cnt = sums[2]
    s_tcl_pos = sums[3]
    s_tcl_neg = sums[4]
    n_valid = sums[5]
    s_rx = sums[6]
    s_ry = sums[7]

    # ----- loss_tr (OHEM) -----
    # TODO(synk): data-dependent top-k (torch.topk with dynamic k) has no clean
    # in-kernel Pallas equivalent; done via sort + index mask on the kernel's
    # per-pixel negative-CE output.
    neg_losses = negce.reshape(-1)                             # CE >= 0, zeros elsewhere
    sorted_neg = jnp.sort(neg_losses)[::-1]
    n_neg = jnp.where(n_pos > 0,
                      jnp.minimum(n_neg_cnt, jnp.floor(OHEM_RATIO * n_pos)),
                      jnp.float32(100.0))
    idx = jnp.arange(sorted_neg.shape[0], dtype=jnp.float32)
    topk_sum = jnp.sum(jnp.where(idx < n_neg, sorted_neg, 0.0))
    loss_pos = jnp.where(n_pos > 0, loss_pos_sum, 0.0)
    loss_tr = (loss_pos + topk_sum) / (n_pos + n_neg)

    # ----- loss_tcl -----
    n_tn = n_valid - n_pos                                     # |1 - tr_train_mask|
    ce_pos_mean = s_tcl_pos / jnp.maximum(n_pos, 1.0)
    ce_neg_mean = s_tcl_neg / jnp.maximum(n_tn, 1.0)
    loss_tcl = jnp.where(n_pos > 0, ce_pos_mean + 0.5 * ce_neg_mean, 0.0)

    # ----- loss_reg_x / loss_reg_y -----
    denom = jnp.maximum(n_pos, 1.0) * NUM_SAMPLE
    loss_reg_x = jnp.where(n_pos > 0, s_rx / denom, 0.0)
    loss_reg_y = jnp.where(n_pos > 0, s_ry / denom, 0.0)

    return loss_tr, loss_tcl, loss_reg_x, loss_reg_y


@jax.jit
def fce_loss_forward(p3_cls, p3_reg, p4_cls, p4_reg, p5_cls, p5_reg,
                     p3_gt, p4_gt, p5_gt):
    mt = _fused_transform_matrix()
    preds = [(p3_cls, p3_reg), (p4_cls, p4_reg), (p5_cls, p5_reg)]
    gts = [p3_gt, p4_gt, p5_gt]

    loss_tr = jnp.float32(0.0)
    loss_tcl = jnp.float32(0.0)
    loss_reg_x = jnp.float32(0.0)
    loss_reg_y = jnp.float32(0.0)
    for (cls_p, reg_p), gt in zip(preds, gts):
        lt, lc, lx, ly = _forward_single(cls_p, reg_p, gt, mt)
        loss_tr += lt
        loss_tcl += lc
        loss_reg_x += lx
        loss_reg_y += ly
    return dict(loss_text=loss_tr, loss_center=loss_tcl,
                loss_reg_x=loss_reg_x, loss_reg_y=loss_reg_y)


# ------------------------------------ main ------------------------------------
if __name__ == "__main__":
    key = jax.random.PRNGKey(0)
    N = 2
    spatial = [(16, 16), (8, 8), (4, 4)]    # p3, p4, p5 pyramid levels

    preds = []
    gts = []
    for (H, W) in spatial:
        key, k1, k2, k3, k4, k5 = jax.random.split(key, 6)
        cls_p = jax.random.normal(k1, (N, 4, H, W), jnp.float32)
        reg_p = jax.random.normal(k2, (N, NREG, H, W), jnp.float32)
        # gt maps: [tr_mask, tcl_mask, train_mask, x_map(K), y_map(K)] -> 4*fd+5 ch
        tr = jax.random.bernoulli(k3, 0.3, (N, 1, H, W)).astype(jnp.float32)
        tcl = (jax.random.bernoulli(k4, 0.5, (N, 1, H, W)).astype(jnp.float32) * tr)
        train = jnp.ones((N, 1, H, W), jnp.float32)
        maps = jax.random.normal(k5, (N, NREG, H, W), jnp.float32)
        gt = jnp.concatenate([tr, tcl, train, maps], axis=1)
        assert gt.shape[1] == 4 * FOURIER_DEGREE + 5
        preds.append((cls_p, reg_p))
        gts.append(gt)

    results = fce_loss_forward(preds[0][0], preds[0][1],
                               preds[1][0], preds[1][1],
                               preds[2][0], preds[2][1],
                               gts[0], gts[1], gts[2])
    jax.block_until_ready(results)
    print("KERNEL_OK")
</pallas_src>

<mosaic_0001>
module attributes {stable_mosaic.version = 11 : i64} {
  func.func @kernel(%arg0: i32, %arg1: i32, %arg2: memref<1x4x256xf32, #tpu.memory_space<vmem>>, %arg3: memref<1x10x256xf32, #tpu.memory_space<vmem>>, %arg4: memref<1x13x256xf32, #tpu.memory_space<vmem>>, %arg5: memref<32x10xf32, #tpu.memory_space<vmem>>, %arg6: memref<1x1x256xf32, #tpu.memory_space<vmem>>, %arg7: memref<1x1x8x128xf32, #tpu.memory_space<vmem>>) attributes {dimension_semantics = [#tpu.dimension_semantics<parallel>, #tpu.dimension_semantics<parallel>], iteration_bounds = array<i64: 2, 1>, scalar_prefetch = 0 : i64, scratch_operands = 0 : i64, tpu.core_type = #tpu.core_type<tc>, window_params = [{transform_indices = @transform_0, window_bounds = array<i64: 1, 4, 256>}, {transform_indices = @transform_1, window_bounds = array<i64: 1, 10, 256>}, {transform_indices = @transform_2, window_bounds = array<i64: 1, 13, 256>}, {pipeline_mode = #tpu.pipeline_mode<synchronous>, transform_indices = @transform_3, window_bounds = array<i64: 32, 10>}, {transform_indices = @transform_4, window_bounds = array<i64: 1, 1, 256>}, {transform_indices = @transform_5, window_bounds = array<i64: 1, 1, 8, 128>}]} {
    %c0 = arith.constant 0 : index
    %c0_0 = arith.constant 0 : index
    %c0_1 = arith.constant 0 : index
    %0 = vector.load %arg2[%c0, %c0_0, %c0_1] : memref<1x4x256xf32, #tpu.memory_space<vmem>>, vector<1x4x256xf32>
    %1 = vector.shape_cast %0 : vector<1x4x256xf32> to vector<4x256xf32>
    %c0_2 = arith.constant 0 : index
    %c0_3 = arith.constant 0 : index
    %c0_4 = arith.constant 0 : index
    %2 = vector.load %arg3[%c0_2, %c0_3, %c0_4] : memref<1x10x256xf32, #tpu.memory_space<vmem>>, vector<1x10x256xf32>
    %3 = vector.shape_cast %2 : vector<1x10x256xf32> to vector<10x256xf32>
    %c0_5 = arith.constant 0 : index
    %c0_6 = arith.constant 0 : index
    %c0_7 = arith.constant 0 : index
    %4 = vector.load %arg4[%c0_5, %c0_6, %c0_7] : memref<1x13x256xf32, #tpu.memory_space<vmem>>, vector<1x13x256xf32>
    %5 = vector.shape_cast %4 : vector<1x13x256xf32> to vector<13x256xf32>
    %c0_8 = arith.constant 0 : index
    %c0_9 = arith.constant 0 : index
    %6 = vector.load %arg5[%c0_8, %c0_9] : memref<32x10xf32, #tpu.memory_space<vmem>>, vector<32x10xf32>
    %cst = arith.constant 1.000000e+00 : f32
    %7 = vector.broadcast %cst : f32 to vector<1x256xf32>
    %8 = vector.extract_strided_slice %5 {offsets = [0, 0], sizes = [1, 256], strides = [1, 1]} : vector<13x256xf32> to vector<1x256xf32>
    %9 = vector.extract_strided_slice %5 {offsets = [1, 0], sizes = [1, 256], strides = [1, 1]} : vector<13x256xf32> to vector<1x256xf32>
    %10 = vector.extract_strided_slice %5 {offsets = [2, 0], sizes = [1, 256], strides = [1, 1]} : vector<13x256xf32> to vector<1x256xf32>
    %11 = vector.extract_strided_slice %1 {offsets = [0, 0], sizes = [1, 256], strides = [1, 1]} : vector<4x256xf32> to vector<1x256xf32>
    %12 = vector.extract_strided_slice %1 {offsets = [1, 0], sizes = [1, 256], strides = [1, 1]} : vector<4x256xf32> to vector<1x256xf32>
    %13 = arith.maximumf %11, %12 : vector<1x256xf32>
    %14 = arith.subf %11, %13 : vector<1x256xf32>
    %15 = math.exp %14 : vector<1x256xf32>
    %16 = arith.subf %12, %13 : vector<1x256xf32>
    %17 = math.exp %16 : vector<1x256xf32>
    %18 = arith.addf %15, %17 : vector<1x256xf32>
    %19 = math.log %18 : vector<1x256xf32>
    %20 = arith.addf %13, %19 : vector<1x256xf32>
    %cst_10 = arith.constant 5.000000e-01 : f32
    %21 = vector.broadcast %cst_10 : f32 to vector<1x256xf32>
    %22 = arith.cmpf ogt, %8, %21 : vector<1x256xf32>
    %23 = arith.select %22, %12, %11 : vector<1x256xi1>, vector<1x256xf32>
    %24 = arith.subf %20, %23 : vector<1x256xf32>
    %25 = vector.extract_strided_slice %1 {offsets = [2, 0], sizes = [1, 256], strides = [1, 1]} : vector<4x256xf32> to vector<1x256xf32>
    %26 = vector.extract_strided_slice %1 {offsets = [3, 0], sizes = [1, 256], strides = [1, 1]} : vector<4x256xf32> to vector<1x256xf32>
    %27 = arith.maximumf %25, %26 : vector<1x256xf32>
    %28 = arith.subf %25, %27 : vector<1x256xf32>
    %29 = math.exp %28 : vector<1x256xf32>
    %30 = arith.subf %26, %27 : vector<1x256xf32>
    %31 = math.exp %30 : vector<1x256xf32>
    %32 = arith.addf %29, %31 : vector<1x256xf32>
    %33 = math.log %32 : vector<1x256xf32>
    %34 = arith.addf %27, %33 : vector<1x256xf32>
    %cst_11 = arith.constant 5.000000e-01 : f32
    %35 = vector.broadcast %cst_11 : f32 to vector<1x256xf32>
    %36 = arith.cmpf ogt, %9, %35 : vector<1x256xf32>
    %37 = arith.select %36, %26, %25 : vector<1x256xi1>, vector<1x256xf32>
    %38 = arith.subf %34, %37 : vector<1x256xf32>
    %39 = vector.extract_strided_slice %5 {offsets = [3, 0], sizes = [10, 256], strides = [1, 1]} : vector<13x256xf32> to vector<10x256xf32>
    %40 = arith.subf %3, %39 : vector<10x256xf32>
    %cst_12 = arith.constant dense<0.000000e+00> : vector<32x256xf32>
    %41 = tpu.matmul %6, %40, %cst_12 {dimension_numbers = #tpu.dot_dimension_numbers<[1], [0], [0], [1], [0, 0, 1, 1], [], []>} : vector<32x10xf32>, vector<10x256xf32>, vector<32x256xf32> -> vector<32x256xf32>
    %42 = math.absf %41 : vector<32x256xf32>
    %cst_13 = arith.constant 1.000000e+00 : f32
    %43 = vector.broadcast %cst_13 : f32 to vector<32x256xf32>
    %44 = arith.cmpf olt, %42, %43 : vector<32x256xf32>
    %cst_14 = arith.constant 5.000000e-01 : f32
    %45 = vector.broadcast %cst_14 : f32 to vector<32x256xf32>
    %46 = arith.mulf %45, %41 : vector<32x256xf32>
    %47 = arith.mulf %46, %41 : vector<32x256xf32>
    %cst_15 = arith.constant 5.000000e-01 : f32
    %48 = vector.broadcast %cst_15 : f32 to vector<32x256xf32>
    %49 = arith.subf %42, %48 : vector<32x256xf32>
    %50 = arith.select %44, %47, %49 : vector<32x256xi1>, vector<32x256xf32>
    %51 = vector.extract_strided_slice %50 {offsets = [0, 0], sizes = [16, 256], strides = [1, 1]} : vector<32x256xf32> to vector<16x256xf32>
    %cst_16 = arith.constant dense<0.000000e+00> : vector<256xf32>
    %52 = vector.multi_reduction <add>, %51, %cst_16 [0] : vector<16x256xf32> to vector<256xf32>
    %53 = vector.shape_cast %52 : vector<256xf32> to vector<1x256xf32>
    %54 = vector.extract_strided_slice %50 {offsets = [16, 0], sizes = [16, 256], strides = [1, 1]} : vector<32x256xf32> to vector<16x256xf32>
    %cst_17 = arith.constant dense<0.000000e+00> : vector<256xf32>
    %55 = vector.multi_reduction <add>, %54, %cst_17 [0] : vector<16x256xf32> to vector<256xf32>
    %56 = vector.shape_cast %55 : vector<256xf32> to vector<1x256xf32>
    %57 = arith.addf %8, %9 : vector<1x256xf32>
    %cst_18 = arith.constant 5.000000e-01 : f32
    %58 = vector.broadcast %cst_18 : f32 to vector<1x256xf32>
    %59 = arith.mulf %57, %58 : vector<1x256xf32>
    %60 = arith.mulf %59, %53 : vector<1x256xf32>
    %61 = arith.mulf %59, %56 : vector<1x256xf32>
    %62 = arith.mulf %8, %10 : vector<1x256xf32>
    %cst_19 = arith.constant 1.000000e+00 : f32
    %63 = vector.broadcast %cst_19 : f32 to vector<1x256xf32>
    %64 = arith.subf %63, %8 : vector<1x256xf32>
    %65 = arith.mulf %64, %10 : vector<1x256xf32>
    %66 = arith.mulf %65, %24 : vector<1x256xf32>
    %c0_20 = arith.constant 0 : index
    %c0_21 = arith.constant 0 : index
    %c0_22 = arith.constant 0 : index
    %67 = vector.load %arg6[%c0_20, %c0_21, %c0_22] : memref<1x1x256xf32, #tpu.memory_space<vmem>>, vector<1x1x256xf32>
    %68 = vector.shape_cast %67 : vector<1x1x256xf32> to vector<1x256xf32>
    %69 = vector.shape_cast %66 : vector<1x256xf32> to vector<1x1x256xf32>
    tpu.vector_store %arg6[%c0_20, %c0_21, %c0_22], %69 {strides = array<i32>} : memref<1x1x256xf32, #tpu.memory_space<vmem>>, vector<1x1x256xf32>,
    %70 = arith.mulf %62, %24 : vector<1x256xf32>
    %71 = arith.mulf %62, %38 : vector<1x256xf32>
    %72 = arith.subf %7, %62 : vector<1x256xf32>
    %73 = arith.mulf %72, %38 : vector<1x256xf32>
    %74 = arith.mulf %62, %60 : vector<1x256xf32>
    %75 = arith.mulf %62, %61 : vector<1x256xf32>
    %76 = tpu.concatenate %62, %70, %65, %71, %73, %7, %74, %75 in 0 : vector<1x256xf32>, vector<1x256xf32>, vector<1x256xf32>, vector<1x256xf32>, vector<1x256xf32>, vector<1x256xf32>, vector<1x256xf32>, vector<1x256xf32> -> vector<8x256xf32>
    %cst_23 = arith.constant dense<0.000000e+00> : vector<8xf32>
    %77 = vector.multi_reduction <add>, %76, %cst_23 [1] : vector<8x256xf32> to vector<8xf32>
    %78 = vector.shape_cast %77 : vector<8xf32> to vector<8x1xf32>
    %79 = vector.shape_cast %78 : vector<8x1xf32> to vector<8x1xf32>
    %80 = vector.broadcast %79 : vector<8x1xf32> to vector<8x128xf32>
    %c0_24 = arith.constant 0 : index
    %c0_25 = arith.constant 0 : index
    %c0_26 = arith.constant 0 : index
    %c0_27 = arith.constant 0 : index
    %81 = vector.load %arg7[%c0_24, %c0_25, %c0_26, %c0_27] : memref<1x1x8x128xf32, #tpu.memory_space<vmem>>, vector<1x1x8x128xf32>
    %82 = vector.shape_cast %81 : vector<1x1x8x128xf32> to vector<8x128xf32>
    %83 = vector.shape_cast %80 : vector<8x128xf32> to vector<1x1x8x128xf32>
    tpu.vector_store %arg7[%c0_24, %c0_25, %c0_26, %c0_27], %83 {strides = array<i32>} : memref<1x1x8x128xf32, #tpu.memory_space<vmem>>, vector<1x1x8x128xf32>,
    return
  }
  func.func @transform_0(%arg0: i32, %arg1: i32) -> (i32, i32, i32) {
    %c0_i32 = arith.constant 0 : i32
    %c0_i32_0 = arith.constant 0 : i32
    return %arg0, %c0_i32, %arg1 : i32, i32, i32
  }
  func.func @transform_1(%arg0: i32, %arg1: i32) -> (i32, i32, i32) {
    %c0_i32 = arith.constant 0 : i32
    %c0_i32_0 = arith.constant 0 : i32
    return %arg0, %c0_i32, %arg1 : i32, i32, i32
  }
  func.func @transform_2(%arg0: i32, %arg1: i32) -> (i32, i32, i32) {
    %c0_i32 = arith.constant 0 : i32
    %c0_i32_0 = arith.constant 0 : i32
    return %arg0, %c0_i32, %arg1 : i32, i32, i32
  }
  func.func @transform_3(%arg0: i32, %arg1: i32) -> (i32, i32) {
    %c0_i32 = arith.constant 0 : i32
    %c0_i32_0 = arith.constant 0 : i32
    %c0_i32_1 = arith.constant 0 : i32
    return %c0_i32, %c0_i32_0 : i32, i32
  }
  func.func @transform_4(%arg0: i32, %arg1: i32) -> (i32, i32, i32) {
    %c0_i32 = arith.constant 0 : i32
    %c0_i32_0 = arith.constant 0 : i32
    return %arg0, %c0_i32, %arg1 : i32, i32, i32
  }
  func.func @transform_5(%arg0: i32, %arg1: i32) -> (i32, i32, i32, i32) {
    %c0_i32 = arith.constant 0 : i32
    %c0_i32_0 = arith.constant 0 : i32
    %c0_i32_1 = arith.constant 0 : i32
    return %arg0, %arg1, %c0_i32, %c0_i32_0 : i32, i32, i32, i32
  }
}

module attributes {stable_mosaic.version = 11 : i64} {
  func.func @kernel(%arg0: i32, %arg1: i32, %arg2: memref<1x4x64xf32, #tpu.memory_space<vmem>>, %arg3: memref<1x10x64xf32, #tpu.memory_space<vmem>>, %arg4: memref<1x13x64xf32, #tpu.memory_space<vmem>>, %arg5: memref<32x10xf32, #tpu.memory_space<vmem>>, %arg6: memref<1x1x64xf32, #tpu.memory_space<vmem>>, %arg7: memref<1x1x8x128xf32, #tpu.memory_space<vmem>>) attributes {dimension_semantics = [#tpu.dimension_semantics<parallel>, #tpu.dimension_semantics<parallel>], iteration_bounds = array<i64: 2, 1>, scalar_prefetch = 0 : i64, scratch_operands = 0 : i64, tpu.core_type = #tpu.core_type<tc>, window_params = [{transform_indices = @transform_0, window_bounds = array<i64: 1, 4, 64>}, {transform_indices = @transform_1, window_bounds = array<i64: 1, 10, 64>}, {transform_indices = @transform_2, window_bounds = array<i64: 1, 13, 64>}, {pipeline_mode = #tpu.pipeline_mode<synchronous>, transform_indices = @transform_3, window_bounds = array<i64: 32, 10>}, {transform_indices = @transform_4, window_bounds = array<i64: 1, 1, 64>}, {transform_indices = @transform_5, window_bounds = array<i64: 1, 1, 8, 128>}]} {
    %c0 = arith.constant 0 : index
    %c0_0 = arith.constant 0 : index
    %c0_1 = arith.constant 0 : index
    %0 = vector.load %arg2[%c0, %c0_0, %c0_1] : memref<1x4x64xf32, #tpu.memory_space<vmem>>, vector<1x4x64xf32>
    %1 = vector.shape_cast %0 : vector<1x4x64xf32> to vector<4x64xf32>
    %c0_2 = arith.constant 0 : index
    %c0_3 = arith.constant 0 : index
    %c0_4 = arith.constant 0 : index
    %2 = vector.load %arg3[%c0_2, %c0_3, %c0_4] : memref<1x10x64xf32, #tpu.memory_space<vmem>>, vector<1x10x64xf32>
    %3 = vector.shape_cast %2 : vector<1x10x64xf32> to vector<10x64xf32>
    %c0_5 = arith.constant 0 : index
    %c0_6 = arith.constant 0 : index
    %c0_7 = arith.constant 0 : index
    %4 = vector.load %arg4[%c0_5, %c0_6, %c0_7] : memref<1x13x64xf32, #tpu.memory_space<vmem>>, vector<1x13x64xf32>
    %5 = vector.shape_cast %4 : vector<1x13x64xf32> to vector<13x64xf32>
    %c0_8 = arith.constant 0 : index
    %c0_9 = arith.constant 0 : index
    %6 = vector.load %arg5[%c0_8, %c0_9] : memref<32x10xf32, #tpu.memory_space<vmem>>, vector<32x10xf32>
    %cst = arith.constant 1.000000e+00 : f32
    %7 = vector.broadcast %cst : f32 to vector<1x64xf32>
    %8 = vector.extract_strided_slice %5 {offsets = [0, 0], sizes = [1, 64], strides = [1, 1]} : vector<13x64xf32> to vector<1x64xf32>
    %9 = vector.extract_strided_slice %5 {offsets = [1, 0], sizes = [1, 64], strides = [1, 1]} : vector<13x64xf32> to vector<1x64xf32>
    %10 = vector.extract_strided_slice %5 {offsets = [2, 0], sizes = [1, 64], strides = [1, 1]} : vector<13x64xf32> to vector<1x64xf32>
    %11 = vector.extract_strided_slice %1 {offsets = [0, 0], sizes = [1, 64], strides = [1, 1]} : vector<4x64xf32> to vector<1x64xf32>
    %12 = vector.extract_strided_slice %1 {offsets = [1, 0], sizes = [1, 64], strides = [1, 1]} : vector<4x64xf32> to vector<1x64xf32>
    %13 = arith.maximumf %11, %12 : vector<1x64xf32>
    %14 = arith.subf %11, %13 : vector<1x64xf32>
    %15 = math.exp %14 : vector<1x64xf32>
    %16 = arith.subf %12, %13 : vector<1x64xf32>
    %17 = math.exp %16 : vector<1x64xf32>
    %18 = arith.addf %15, %17 : vector<1x64xf32>
    %19 = math.log %18 : vector<1x64xf32>
    %20 = arith.addf %13, %19 : vector<1x64xf32>
    %cst_10 = arith.constant 5.000000e-01 : f32
    %21 = vector.broadcast %cst_10 : f32 to vector<1x64xf32>
    %22 = arith.cmpf ogt, %8, %21 : vector<1x64xf32>
    %23 = arith.select %22, %12, %11 : vector<1x64xi1>, vector<1x64xf32>
    %24 = arith.subf %20, %23 : vector<1x64xf32>
    %25 = vector.extract_strided_slice %1 {offsets = [2, 0], sizes = [1, 64], strides = [1, 1]} : vector<4x64xf32> to vector<1x64xf32>
    %26 = vector.extract_strided_slice %1 {offsets = [3, 0], sizes = [1, 64], strides = [1, 1]} : vector<4x64xf32> to vector<1x64xf32>
    %27 = arith.maximumf %25, %26 : vector<1x64xf32>
    %28 = arith.subf %25, %27 : vector<1x64xf32>
    %29 = math.exp %28 : vector<1x64xf32>
    %30 = arith.subf %26, %27 : vector<1x64xf32>
    %31 = math.exp %30 : vector<1x64xf32>
    %32 = arith.addf %29, %31 : vector<1x64xf32>
    %33 = math.log %32 : vector<1x64xf32>
    %34 = arith.addf %27, %33 : vector<1x64xf32>
    %cst_11 = arith.constant 5.000000e-01 : f32
    %35 = vector.broadcast %cst_11 : f32 to vector<1x64xf32>
    %36 = arith.cmpf ogt, %9, %35 : vector<1x64xf32>
    %37 = arith.select %36, %26, %25 : vector<1x64xi1>, vector<1x64xf32>
    %38 = arith.subf %34, %37 : vector<1x64xf32>
    %39 = vector.extract_strided_slice %5 {offsets = [3, 0], sizes = [10, 64], strides = [1, 1]} : vector<13x64xf32> to vector<10x64xf32>
    %40 = arith.subf %3, %39 : vector<10x64xf32>
    %cst_12 = arith.constant dense<0.000000e+00> : vector<32x64xf32>
    %41 = tpu.matmul %6, %40, %cst_12 {dimension_numbers = #tpu.dot_dimension_numbers<[1], [0], [0], [1], [0, 0, 1, 1], [], []>} : vector<32x10xf32>, vector<10x64xf32>, vector<32x64xf32> -> vector<32x64xf32>
    %42 = math.absf %41 : vector<32x64xf32>
    %cst_13 = arith.constant 1.000000e+00 : f32
    %43 = vector.broadcast %cst_13 : f32 to vector<32x64xf32>
    %44 = arith.cmpf olt, %42, %43 : vector<32x64xf32>
    %cst_14 = arith.constant 5.000000e-01 : f32
    %45 = vector.broadcast %cst_14 : f32 to vector<32x64xf32>
    %46 = arith.mulf %45, %41 : vector<32x64xf32>
    %47 = arith.mulf %46, %41 : vector<32x64xf32>
    %cst_15 = arith.constant 5.000000e-01 : f32
    %48 = vector.broadcast %cst_15 : f32 to vector<32x64xf32>
    %49 = arith.subf %42, %48 : vector<32x64xf32>
    %50 = arith.select %44, %47, %49 : vector<32x64xi1>, vector<32x64xf32>
    %51 = vector.extract_strided_slice %50 {offsets = [0, 0], sizes = [16, 64], strides = [1, 1]} : vector<32x64xf32> to vector<16x64xf32>
    %cst_16 = arith.constant dense<0.000000e+00> : vector<64xf32>
    %52 = vector.multi_reduction <add>, %51, %cst_16 [0] : vector<16x64xf32> to vector<64xf32>
    %53 = vector.shape_cast %52 : vector<64xf32> to vector<1x64xf32>
    %54 = vector.extract_strided_slice %50 {offsets = [16, 0], sizes = [16, 64], strides = [1, 1]} : vector<32x64xf32> to vector<16x64xf32>
    %cst_17 = arith.constant dense<0.000000e+00> : vector<64xf32>
    %55 = vector.multi_reduction <add>, %54, %cst_17 [0] : vector<16x64xf32> to vector<64xf32>
    %56 = vector.shape_cast %55 : vector<64xf32> to vector<1x64xf32>
    %57 = arith.addf %8, %9 : vector<1x64xf32>
    %cst_18 = arith.constant 5.000000e-01 : f32
    %58 = vector.broadcast %cst_18 : f32 to vector<1x64xf32>
    %59 = arith.mulf %57, %58 : vector<1x64xf32>
    %60 = arith.mulf %59, %53 : vector<1x64xf32>
    %61 = arith.mulf %59, %56 : vector<1x64xf32>
    %62 = arith.mulf %8, %10 : vector<1x64xf32>
    %cst_19 = arith.constant 1.000000e+00 : f32
    %63 = vector.broadcast %cst_19 : f32 to vector<1x64xf32>
    %64 = arith.subf %63, %8 : vector<1x64xf32>
    %65 = arith.mulf %64, %10 : vector<1x64xf32>
    %66 = arith.mulf %65, %24 : vector<1x64xf32>
    %c0_20 = arith.constant 0 : index
    %c0_21 = arith.constant 0 : index
    %c0_22 = arith.constant 0 : index
    %67 = vector.load %arg6[%c0_20, %c0_21, %c0_22] : memref<1x1x64xf32, #tpu.memory_space<vmem>>, vector<1x1x64xf32>
    %68 = vector.shape_cast %67 : vector<1x1x64xf32> to vector<1x64xf32>
    %69 = vector.shape_cast %66 : vector<1x64xf32> to vector<1x1x64xf32>
    tpu.vector_store %arg6[%c0_20, %c0_21, %c0_22], %69 {strides = array<i32>} : memref<1x1x64xf32, #tpu.memory_space<vmem>>, vector<1x1x64xf32>,
    %70 = arith.mulf %62, %24 : vector<1x64xf32>
    %71 = arith.mulf %62, %38 : vector<1x64xf32>
    %72 = arith.subf %7, %62 : vector<1x64xf32>
    %73 = arith.mulf %72, %38 : vector<1x64xf32>
    %74 = arith.mulf %62, %60 : vector<1x64xf32>
    %75 = arith.mulf %62, %61 : vector<1x64xf32>
    %76 = tpu.concatenate %62, %70, %65, %71, %73, %7, %74, %75 in 0 : vector<1x64xf32>, vector<1x64xf32>, vector<1x64xf32>, vector<1x64xf32>, vector<1x64xf32>, vector<1x64xf32>, vector<1x64xf32>, vector<1x64xf32> -> vector<8x64xf32>
    %cst_23 = arith.constant dense<0.000000e+00> : vector<8xf32>
    %77 = vector.multi_reduction <add>, %76, %cst_23 [1] : vector<8x64xf32> to vector<8xf32>
    %78 = vector.shape_cast %77 : vector<8xf32> to vector<8x1xf32>
    %79 = vector.shape_cast %78 : vector<8x1xf32> to vector<8x1xf32>
    %80 = vector.broadcast %79 : vector<8x1xf32> to vector<8x128xf32>
    %c0_24 = arith.constant 0 : index
    %c0_25 = arith.constant 0 : index
    %c0_26 = arith.constant 0 : index
    %c0_27 = arith.constant 0 : index
    %81 = vector.load %arg7[%c0_24, %c0_25, %c0_26, %c0_27] : memref<1x1x8x128xf32, #tpu.memory_space<vmem>>, vector<1x1x8x128xf32>
    %82 = vector.shape_cast %81 : vector<1x1x8x128xf32> to vector<8x128xf32>
    %83 = vector.shape_cast %80 : vector<8x128xf32> to vector<1x1x8x128xf32>
    tpu.vector_store %arg7[%c0_24, %c0_25, %c0_26, %c0_27], %83 {strides = array<i32>} : memref<1x1x8x128xf32, #tpu.memory_space<vmem>>, vector<1x1x8x128xf32>,
    return
  }
  func.func @transform_0(%arg0: i32, %arg1: i32) -> (i32, i32, i32) {
    %c0_i32 = arith.constant 0 : i32
    %c0_i32_0 = arith.constant 0 : i32
    return %arg0, %c0_i32, %arg1 : i32, i32, i32
  }
  func.func @transform_1(%arg0: i32, %arg1: i32) -> (i32, i32, i32) {
    %c0_i32 = arith.constant 0 : i32
    %c0_i32_0 = arith.constant 0 : i32
    return %arg0, %c0_i32, %arg1 : i32, i32, i32
  }
  func.func @transform_2(%arg0: i32, %arg1: i32) -> (i32, i32, i32) {
    %c0_i32 = arith.constant 0 : i32
    %c0_i32_0 = arith.constant 0 : i32
    return %arg0, %c0_i32, %arg1 : i32, i32, i32
  }
  func.func @transform_3(%arg0: i32, %arg1: i32) -> (i32, i32) {
    %c0_i32 = arith.constant 0 : i32
    %c0_i32_0 = arith.constant 0 : i32
    %c0_i32_1 = arith.constant 0 : i32
    return %c0_i32, %c0_i32_0 : i32, i32
  }
  func.func @transform_4(%arg0: i32, %arg1: i32) -> (i32, i32, i32) {
    %c0_i32 = arith.constant 0 : i32
    %c0_i32_0 = arith.constant 0 : i32
    return %arg0, %c0_i32, %arg1 : i32, i32, i32
  }
  func.func @transform_5(%arg0: i32, %arg1: i32) -> (i32, i32, i32, i32) {
    %c0_i32 = arith.constant 0 : i32
    %c0_i32_0 = arith.constant 0 : i32
    %c0_i32_1 = arith.constant 0 : i32
    return %arg0, %arg1, %c0_i32, %c0_i32_0 : i32, i32, i32, i32
  }
}

module attributes {stable_mosaic.version = 11 : i64} {
  func.func @kernel(%arg0: i32, %arg1: i32, %arg2: memref<1x4x16xf32, #tpu.memory_space<vmem>>, %arg3: memref<1x10x16xf32, #tpu.memory_space<vmem>>, %arg4: memref<1x13x16xf32, #tpu.memory_space<vmem>>, %arg5: memref<32x10xf32, #tpu.memory_space<vmem>>, %arg6: memref<1x1x16xf32, #tpu.memory_space<vmem>>, %arg7: memref<1x1x8x128xf32, #tpu.memory_space<vmem>>) attributes {dimension_semantics = [#tpu.dimension_semantics<parallel>, #tpu.dimension_semantics<parallel>], iteration_bounds = array<i64: 2, 1>, scalar_prefetch = 0 : i64, scratch_operands = 0 : i64, tpu.core_type = #tpu.core_type<tc>, window_params = [{transform_indices = @transform_0, window_bounds = array<i64: 1, 4, 16>}, {transform_indices = @transform_1, window_bounds = array<i64: 1, 10, 16>}, {transform_indices = @transform_2, window_bounds = array<i64: 1, 13, 16>}, {pipeline_mode = #tpu.pipeline_mode<synchronous>, transform_indices = @transform_3, window_bounds = array<i64: 32, 10>}, {transform_indices = @transform_4, window_bounds = array<i64: 1, 1, 16>}, {transform_indices = @transform_5, window_bounds = array<i64: 1, 1, 8, 128>}]} {
    %c0 = arith.constant 0 : index
    %c0_0 = arith.constant 0 : index
    %c0_1 = arith.constant 0 : index
    %0 = vector.load %arg2[%c0, %c0_0, %c0_1] : memref<1x4x16xf32, #tpu.memory_space<vmem>>, vector<1x4x16xf32>
    %1 = vector.shape_cast %0 : vector<1x4x16xf32> to vector<4x16xf32>
    %c0_2 = arith.constant 0 : index
    %c0_3 = arith.constant 0 : index
    %c0_4 = arith.constant 0 : index
    %2 = vector.load %arg3[%c0_2, %c0_3, %c0_4] : memref<1x10x16xf32, #tpu.memory_space<vmem>>, vector<1x10x16xf32>
    %3 = vector.shape_cast %2 : vector<1x10x16xf32> to vector<10x16xf32>
    %c0_5 = arith.constant 0 : index
    %c0_6 = arith.constant 0 : index
    %c0_7 = arith.constant 0 : index
    %4 = vector.load %arg4[%c0_5, %c0_6, %c0_7] : memref<1x13x16xf32, #tpu.memory_space<vmem>>, vector<1x13x16xf32>
    %5 = vector.shape_cast %4 : vector<1x13x16xf32> to vector<13x16xf32>
    %c0_8 = arith.constant 0 : index
    %c0_9 = arith.constant 0 : index
    %6 = vector.load %arg5[%c0_8, %c0_9] : memref<32x10xf32, #tpu.memory_space<vmem>>, vector<32x10xf32>
    %cst = arith.constant 1.000000e+00 : f32
    %7 = vector.broadcast %cst : f32 to vector<1x16xf32>
    %8 = vector.extract_strided_slice %5 {offsets = [0, 0], sizes = [1, 16], strides = [1, 1]} : vector<13x16xf32> to vector<1x16xf32>
    %9 = vector.extract_strided_slice %5 {offsets = [1, 0], sizes = [1, 16], strides = [1, 1]} : vector<13x16xf32> to vector<1x16xf32>
    %10 = vector.extract_strided_slice %5 {offsets = [2, 0], sizes = [1, 16], strides = [1, 1]} : vector<13x16xf32> to vector<1x16xf32>
    %11 = vector.extract_strided_slice %1 {offsets = [0, 0], sizes = [1, 16], strides = [1, 1]} : vector<4x16xf32> to vector<1x16xf32>
    %12 = vector.extract_strided_slice %1 {offsets = [1, 0], sizes = [1, 16], strides = [1, 1]} : vector<4x16xf32> to vector<1x16xf32>
    %13 = arith.maximumf %11, %12 : vector<1x16xf32>
    %14 = arith.subf %11, %13 : vector<1x16xf32>
    %15 = math.exp %14 : vector<1x16xf32>
    %16 = arith.subf %12, %13 : vector<1x16xf32>
    %17 = math.exp %16 : vector<1x16xf32>
    %18 = arith.addf %15, %17 : vector<1x16xf32>
    %19 = math.log %18 : vector<1x16xf32>
    %20 = arith.addf %13, %19 : vector<1x16xf32>
    %cst_10 = arith.constant 5.000000e-01 : f32
    %21 = vector.broadcast %cst_10 : f32 to vector<1x16xf32>
    %22 = arith.cmpf ogt, %8, %21 : vector<1x16xf32>
    %23 = arith.select %22, %12, %11 : vector<1x16xi1>, vector<1x16xf32>
    %24 = arith.subf %20, %23 : vector<1x16xf32>
    %25 = vector.extract_strided_slice %1 {offsets = [2, 0], sizes = [1, 16], strides = [1, 1]} : vector<4x16xf32> to vector<1x16xf32>
    %26 = vector.extract_strided_slice %1 {offsets = [3, 0], sizes = [1, 16], strides = [1, 1]} : vector<4x16xf32> to vector<1x16xf32>
    %27 = arith.maximumf %25, %26 : vector<1x16xf32>
    %28 = arith.subf %25, %27 : vector<1x16xf32>
    %29 = math.exp %28 : vector<1x16xf32>
    %30 = arith.subf %26, %27 : vector<1x16xf32>
    %31 = math.exp %30 : vector<1x16xf32>
    %32 = arith.addf %29, %31 : vector<1x16xf32>
    %33 = math.log %32 : vector<1x16xf32>
    %34 = arith.addf %27, %33 : vector<1x16xf32>
    %cst_11 = arith.constant 5.000000e-01 : f32
    %35 = vector.broadcast %cst_11 : f32 to vector<1x16xf32>
    %36 = arith.cmpf ogt, %9, %35 : vector<1x16xf32>
    %37 = arith.select %36, %26, %25 : vector<1x16xi1>, vector<1x16xf32>
    %38 = arith.subf %34, %37 : vector<1x16xf32>
    %39 = vector.extract_strided_slice %5 {offsets = [3, 0], sizes = [10, 16], strides = [1, 1]} : vector<13x16xf32> to vector<10x16xf32>
    %40 = arith.subf %3, %39 : vector<10x16xf32>
    %cst_12 = arith.constant dense<0.000000e+00> : vector<32x16xf32>
    %41 = tpu.matmul %6, %40, %cst_12 {dimension_numbers = #tpu.dot_dimension_numbers<[1], [0], [0], [1], [0, 0, 1, 1], [], []>} : vector<32x10xf32>, vector<10x16xf32>, vector<32x16xf32> -> vector<32x16xf32>
    %42 = math.absf %41 : vector<32x16xf32>
    %cst_13 = arith.constant 1.000000e+00 : f32
    %43 = vector.broadcast %cst_13 : f32 to vector<32x16xf32>
    %44 = arith.cmpf olt, %42, %43 : vector<32x16xf32>
    %cst_14 = arith.constant 5.000000e-01 : f32
    %45 = vector.broadcast %cst_14 : f32 to vector<32x16xf32>
    %46 = arith.mulf %45, %41 : vector<32x16xf32>
    %47 = arith.mulf %46, %41 : vector<32x16xf32>
    %cst_15 = arith.constant 5.000000e-01 : f32
    %48 = vector.broadcast %cst_15 : f32 to vector<32x16xf32>
    %49 = arith.subf %42, %48 : vector<32x16xf32>
    %50 = arith.select %44, %47, %49 : vector<32x16xi1>, vector<32x16xf32>
    %51 = vector.extract_strided_slice %50 {offsets = [0, 0], sizes = [16, 16], strides = [1, 1]} : vector<32x16xf32> to vector<16x16xf32>
    %cst_16 = arith.constant dense<0.000000e+00> : vector<16xf32>
    %52 = vector.multi_reduction <add>, %51, %cst_16 [0] : vector<16x16xf32> to vector<16xf32>
    %53 = vector.shape_cast %52 : vector<16xf32> to vector<1x16xf32>
    %54 = vector.extract_strided_slice %50 {offsets = [16, 0], sizes = [16, 16], strides = [1, 1]} : vector<32x16xf32> to vector<16x16xf32>
    %cst_17 = arith.constant dense<0.000000e+00> : vector<16xf32>
    %55 = vector.multi_reduction <add>, %54, %cst_17 [0] : vector<16x16xf32> to vector<16xf32>
    %56 = vector.shape_cast %55 : vector<16xf32> to vector<1x16xf32>
    %57 = arith.addf %8, %9 : vector<1x16xf32>
    %cst_18 = arith.constant 5.000000e-01 : f32
    %58 = vector.broadcast %cst_18 : f32 to vector<1x16xf32>
    %59 = arith.mulf %57, %58 : vector<1x16xf32>
    %60 = arith.mulf %59, %53 : vector<1x16xf32>
    %61 = arith.mulf %59, %56 : vector<1x16xf32>
    %62 = arith.mulf %8, %10 : vector<1x16xf32>
    %cst_19 = arith.constant 1.000000e+00 : f32
    %63 = vector.broadcast %cst_19 : f32 to vector<1x16xf32>
    %64 = arith.subf %63, %8 : vector<1x16xf32>
    %65 = arith.mulf %64, %10 : vector<1x16xf32>
    %66 = arith.mulf %65, %24 : vector<1x16xf32>
    %c0_20 = arith.constant 0 : index
    %c0_21 = arith.constant 0 : index
    %c0_22 = arith.constant 0 : index
    %67 = vector.load %arg6[%c0_20, %c0_21, %c0_22] : memref<1x1x16xf32, #tpu.memory_space<vmem>>, vector<1x1x16xf32>
    %68 = vector.shape_cast %67 : vector<1x1x16xf32> to vector<1x16xf32>
    %69 = vector.shape_cast %66 : vector<1x16xf32> to vector<1x1x16xf32>
    tpu.vector_store %arg6[%c0_20, %c0_21, %c0_22], %69 {strides = array<i32>} : memref<1x1x16xf32, #tpu.memory_space<vmem>>, vector<1x1x16xf32>,
    %70 = arith.mulf %62, %24 : vector<1x16xf32>
    %71 = arith.mulf %62, %38 : vector<1x16xf32>
    %72 = arith.subf %7, %62 : vector<1x16xf32>
    %73 = arith.mulf %72, %38 : vector<1x16xf32>
    %74 = arith.mulf %62, %60 : vector<1x16xf32>
    %75 = arith.mulf %62, %61 : vector<1x16xf32>
    %76 = tpu.concatenate %62, %70, %65, %71, %73, %7, %74, %75 in 0 : vector<1x16xf32>, vector<1x16xf32>, vector<1x16xf32>, vector<1x16xf32>, vector<1x16xf32>, vector<1x16xf32>, vector<1x16xf32>, vector<1x16xf32> -> vector<8x16xf32>
    %cst_23 = arith.constant dense<0.000000e+00> : vector<8xf32>
    %77 = vector.multi_reduction <add>, %76, %cst_23 [1] : vector<8x16xf32> to vector<8xf32>
    %78 = vector.shape_cast %77 : vector<8xf32> to vector<8x1xf32>
    %79 = vector.shape_cast %78 : vector<8x1xf32> to vector<8x1xf32>
    %80 = vector.broadcast %79 : vector<8x1xf32> to vector<8x128xf32>
    %c0_24 = arith.constant 0 : index
    %c0_25 = arith.constant 0 : index
    %c0_26 = arith.constant 0 : index
    %c0_27 = arith.constant 0 : index
    %81 = vector.load %arg7[%c0_24, %c0_25, %c0_26, %c0_27] : memref<1x1x8x128xf32, #tpu.memory_space<vmem>>, vector<1x1x8x128xf32>
    %82 = vector.shape_cast %81 : vector<1x1x8x128xf32> to vector<8x128xf32>
    %83 = vector.shape_cast %80 : vector<8x128xf32> to vector<1x1x8x128xf32>
    tpu.vector_store %arg7[%c0_24, %c0_25, %c0_26, %c0_27], %83 {strides = array<i32>} : memref<1x1x8x128xf32, #tpu.memory_space<vmem>>, vector<1x1x8x128xf32>,
    return
  }
  func.func @transform_0(%arg0: i32, %arg1: i32) -> (i32, i32, i32) {
    %c0_i32 = arith.constant 0 : i32
    %c0_i32_0 = arith.constant 0 : i32
    return %arg0, %c0_i32, %arg1 : i32, i32, i32
  }
  func.func @transform_1(%arg0: i32, %arg1: i32) -> (i32, i32, i32) {
    %c0_i32 = arith.constant 0 : i32
    %c0_i32_0 = arith.constant 0 : i32
    return %arg0, %c0_i32, %arg1 : i32, i32, i32
  }
  func.func @transform_2(%arg0: i32, %arg1: i32) -> (i32, i32, i32) {
    %c0_i32 = arith.constant 0 : i32
    %c0_i32_0 = arith.constant 0 : i32
    return %arg0, %c0_i32, %arg1 : i32, i32, i32
  }
  func.func @transform_3(%arg0: i32, %arg1: i32) -> (i32, i32) {
    %c0_i32 = arith.constant 0 : i32
    %c0_i32_0 = arith.constant 0 : i32
    %c0_i32_1 = arith.constant 0 : i32
    return %c0_i32, %c0_i32_0 : i32, i32
  }
  func.func @transform_4(%arg0: i32, %arg1: i32) -> (i32, i32, i32) {
    %c0_i32 = arith.constant 0 : i32
    %c0_i32_0 = arith.constant 0 : i32
    return %arg0, %c0_i32, %arg1 : i32, i32, i32
  }
  func.func @transform_5(%arg0: i32, %arg1: i32) -> (i32, i32, i32, i32) {
    %c0_i32 = arith.constant 0 : i32
    %c0_i32_0 = arith.constant 0 : i32
    %c0_i32_1 = arith.constant 0 : i32
    return %arg0, %arg1, %c0_i32, %c0_i32_0 : i32, i32, i32, i32
  }
}

</mosaic_0001>

<llo_original>
// kernel: fce_loss_forward.4
$region0: #{fce_loss_forward.4}
  #allocation0 [shape = 'u32[]', space=smem, size = 0x4, offset = 0x4, fixed_abs, tag = 'smem constant byte address 0x4 - core index']
  #allocation1 [shape = 'u32[144,128]{1,0:T(1,128)}', space=vmem, size = 0x12000, scoped, tag = 'internal scratch']
  %s0 = inlined_call_operand.vmem [shape: f32[2,4,64], index: 0, kind: input, shape index: {}]
  %s1 = inlined_call_operand.vmem [shape: f32[2,10,64], index: 1, kind: input, shape index: {}]
  %s2 = inlined_call_operand.vmem [shape: f32[2,13,64], index: 2, kind: input, shape index: {}]
  %s3 = inlined_call_operand.vmem [shape: f32[32,10], index: 3, kind: input, shape index: {}]
  %s4 = inlined_call_operand.vmem [shape: f32[2,1,64], index: 4, kind: output, shape index: {0}]
  %s5 = inlined_call_operand.vmem [shape: f32[2,1,8,128], index: 5, kind: output, shape index: {1}]
  %6 = xla_tuple %s4, %s5
  %s7 = sld [smem:[#allocation0]]
  $region57: #{fce_loss_forward.4} parent=0
    _
  %s9 = ssub.s32 1, %s7
  %s10 = scalar_select 0, %s9, %s7
  loop: start=0, step=1, limit=4
  $region2: #{fce_loss_forward.4} parent=0 // loop_pre_header
    _
  $region3: #{fce_loss_forward.4} parent=0 // loop_header
    %s12 = sphi 0, %s16
    %p13 = scmp.ge.s32.totalorder %s12, 4
    %s19 = sphi 0, %s31
    %s20 = sphi 0, %s27
    %s21 = sphi 0, %s19
    %s22 = sphi 0, %s20
    %s23 = sphi 0, %s21
    %s24 = sphi 0, %s22
    %s36 = sphi 0, %s38
    %s39 = sphi 0, %s36
    %s40 = sphi 0, %s39
    %s56 = sphi 0, %s40
    %s64 = sphi 0, %s66
    %s67 = sphi 0, %s64
    %s68 = sphi 0, %s67
    %s84 = sphi 0, %s68
    %s92 = sphi 0, %s94
    %s95 = sphi 0, %s92
    %s96 = sphi 0, %s95
    %s112 = sphi 0, %s96
    %s116 = sphi 0, %s116
    %s118 = sphi 0, %s116
    %s119 = sphi 0, %s118
    %s133 = sphi 0, %s119
    %s141 = sphi 0, %s143
    %s144 = sphi 0, %s141
    %s145 = sphi 0, %s144
    %s161 = sphi 0, %s145
    %s169 = sphi 0, %s171
    %s172 = sphi 0, %s169
    %s173 = sphi 0, %s172
    %s189 = sphi 0, %s173
  $region4: #{fce_loss_forward.4} parent=0 // loop_header_branch
    %15 = sbr.rel (%p13) target = $region8
  $region5: #{fce_loss_forward.4} parent=0 // loop_body
    %s17 = ssub.s32 %s12, 1
    %s18 = ssub.s32 %s12, 2
    %s25 = sadd.s32 1, %s20
    %p26 = scmp.ge.s32.totalorder %s25, 1
    %s27 = scalar_select %p26, 0, %s25
    %s28 = sadd.s32 1, %s19
    %s29 = scalar_select %p26, %s28, %s19
    %p30 = scmp.ge.s32.totalorder %s29, 2
    %s31 = scalar_select %p30, 0, %s29
    %s32 = ssub.s32 %s19, %s31
    %s33 = ssub.s32 %s20, %s27
    %s34 = sor.u32 %s32, %s33
    %p35 = scmp.eq.s32.totalorder %s34, 0
    %s37 = sadd.s32 %s36, 1
    %s38 = scalar_select %p35, %s36, %s37
    %p41 = pneg %p35
    %p42 = scmp.eq.s32.totalorder %s12, 1
    %p43 = por %p41, %p42
    %p44 = scmp.ne.s32.totalorder %s36, %s39
    %p45 = scmp.eq.s32.totalorder %s12, 0
    %p46 = por %p44, %p45
    %p47 = scmp.ne.s32.totalorder %s36, %s39
    %p48 = scmp.eq.s32.totalorder %s17, 1
    %p49 = por %p47, %p48
    %p50 = scmp.ne.s32.totalorder %s39, %s40
    %p51 = scmp.eq.s32.totalorder %s17, 0
    %p52 = por %p50, %p51
    %p53 = scmp.ne.s32.totalorder %s39, %s40
    %p54 = scmp.eq.s32.totalorder %s18, 1
    %p55 = por %p53, %p54
    %p57 = scmp.ne.s32.totalorder %s40, %s56
    %p58 = scmp.eq.s32.totalorder %s18, 0
    %p59 = por %p57, %p58
    %s60 = ssub.s32 %s19, %s31
    %s61 = ssub.s32 %s20, %s27
    %s62 = sor.u32 %s60, %s61
    %p63 = scmp.eq.s32.totalorder %s62, 0
    %s65 = sadd.s32 %s64, 1
    %s66 = scalar_select %p63, %s64, %s65
    %p69 = pneg %p63
    %p70 = scmp.eq.s32.totalorder %s12, 1
    %p71 = por %p69, %p70
    %p72 = scmp.ne.s32.totalorder %s64, %s67
    %p73 = scmp.eq.s32.totalorder %s12, 0
    %p74 = por %p72, %p73
    %p75 = scmp.ne.s32.totalorder %s64, %s67
    %p76 = scmp.eq.s32.totalorder %s17, 1
    %p77 = por %p75, %p76
    %p78 = scmp.ne.s32.totalorder %s67, %s68
    %p79 = scmp.eq.s32.totalorder %s17, 0
    %p80 = por %p78, %p79
    %p81 = scmp.ne.s32.totalorder %s67, %s68
    %p82 = scmp.eq.s32.totalorder %s18, 1
    %p83 = por %p81, %p82
    %p85 = scmp.ne.s32.totalorder %s68, %s84
    %p86 = scmp.eq.s32.totalorder %s18, 0
    %p87 = por %p85, %p86
    %s88 = ssub.s32 %s19, %s31
    %s89 = ssub.s32 %s20, %s27
    %s90 = sor.u32 %s88, %s89
    %p91 = scmp.eq.s32.totalorder %s90, 0
    %s93 = sadd.s32 %s92, 1
    %s94 = scalar_select %p91, %s92, %s93
    %p97 = pneg %p91
    %p98 = scmp.eq.s32.totalorder %s12, 1
    %p99 = por %p97, %p98
    %p100 = scmp.ne.s32.totalorder %s92, %s95
    %p101 = scmp.eq.s32.totalorder %s12, 0
    %p102 = por %p100, %p101
    %p103 = scmp.ne.s32.totalorder %s92, %s95
    %p104 = scmp.eq.s32.totalorder %s17, 1
    %p105 = por %p103, %p104
    %p106 = scmp.ne.s32.totalorder %s95, %s96
    %p107 = scmp.eq.s32.totalorder %s17, 0
    %p108 = por %p106, %p107
    %p109 = scmp.ne.s32.totalorder %s95, %s96
    %p110 = scmp.eq.s32.totalorder %s18, 1
    %p111 = por %p109, %p110
    %p113 = scmp.ne.s32.totalorder %s96, %s112
    %p114 = scmp.eq.s32.totalorder %s18, 0
    %p115 = por %p113, %p114
    %s117 = sadd.s32 %s116, 1
    %p120 = scmp.eq.s32.totalorder %s12, 1
    %p121 = scmp.ne.s32.totalorder %s116, %s118
    %p122 = scmp.eq.s32.totalorder %s12, 0
    %p123 = por %p121, %p122
    %p124 = scmp.ne.s32.totalorder %s116, %s118
    %p125 = scmp.eq.s32.totalorder %s17, 1
    %p126 = por %p124, %p125
    %p127 = scmp.ne.s32.totalorder %s118, %s119
    %p128 = scmp.eq.s32.totalorder %s17, 0
    %p129 = por %p127, %p128
    %p130 = scmp.ne.s32.totalorder %s118, %s119
    %p131 = scmp.eq.s32.totalorder %s18, 1
    %p132 = por %p130, %p131
    %p134 = scmp.ne.s32.totalorder %s119, %s133
    %p135 = scmp.eq.s32.totalorder %s18, 0
    %p136 = por %p134, %p135
    %s137 = ssub.s32 %s19, %s31
    %s138 = ssub.s32 %s20, %s27
    %s139 = sor.u32 %s137, %s138
    %p140 = scmp.eq.s32.totalorder %s139, 0
    %s142 = sadd.s32 %s141, 1
    %s143 = scalar_select %p140, %s141, %s142
    %p146 = pneg %p140
    %p147 = scmp.eq.s32.totalorder %s12, 1
    %p148 = por %p146, %p147
    %p149 = scmp.ne.s32.totalorder %s141, %s144
    %p150 = scmp.eq.s32.totalorder %s12, 0
    %p151 = por %p149, %p150
    %p152 = scmp.ne.s32.totalorder %s141, %s144
    %p153 = scmp.eq.s32.totalorder %s17, 1
    %p154 = por %p152, %p153
    %p155 = scmp.ne.s32.totalorder %s144, %s145
    %p156 = scmp.eq.s32.totalorder %s17, 0
    %p157 = por %p155, %p156
    %p158 = scmp.ne.s32.totalorder %s144, %s145
    %p159 = scmp.eq.s32.totalorder %s18, 1
    %p160 = por %p158, %p159
    %p162 = scmp.ne.s32.totalorder %s145, %s161
    %p163 = scmp.eq.s32.totalorder %s18, 0
    %p164 = por %p162, %p163
    %s165 = ssub.s32 %s19, %s31
    %s166 = ssub.s32 %s20, %s27
    %s167 = sor.u32 %s165, %s166
    %p168 = scmp.eq.s32.totalorder %s167, 0
    %s170 = sadd.s32 %s169, 1
    %s171 = scalar_select %p168, %s169, %s170
    %p174 = pneg %p168
    %p175 = scmp.eq.s32.totalorder %s12, 1
    %p176 = por %p174, %p175
    %p177 = scmp.ne.s32.totalorder %s169, %s172
    %p178 = scmp.eq.s32.totalorder %s12, 0
    %p179 = por %p177, %p178
    %p180 = scmp.ne.s32.totalorder %s169, %s172
    %p181 = scmp.eq.s32.totalorder %s17, 1
    %p182 = por %p180, %p181
    %p183 = scmp.ne.s32.totalorder %s172, %s173
    %p184 = scmp.eq.s32.totalorder %s17, 0
    %p185 = por %p183, %p184
    %p186 = scmp.ne.s32.totalorder %s172, %s173
    %p187 = scmp.eq.s32.totalorder %s18, 1
    %p188 = por %p186, %p187
    %p190 = scmp.ne.s32.totalorder %s173, %s189
    %p191 = scmp.eq.s32.totalorder %s18, 0
    %p192 = por %p190, %p191
    %p193 = scmp.le.s32.totalorder 1, %s12
    %p194 = scmp.lt.s32.totalorder %s12, 3
    %p195 = pnand %p193, %p194
    %p196 = pneg %p195
    // Predicated region
    $region9: #{fce_loss_forward.4} parent=5 // pred_check
      _
    $region10: #{fce_loss_forward.4} parent=5 // pred_check_branch
      %198 = sbr.rel (%p195) target = $region12
    $region11: #{fce_loss_forward.4} parent=5 // pred_region
      %s199 = ssub.s32 %s12, 1
      // Predicated region
      $region13: #{fce_loss_forward.4} parent=11 // pred_check
        %p200 = pneg %p129
      $region14: #{fce_loss_forward.4} parent=11 // pred_check_branch
        %202 = sbr.rel (%p200) target = $region16
      $region15: #{fce_loss_forward.4} parent=11 // pred_region
        _
      $region16: #{fce_loss_forward.4} parent=11 // pred_fallthru
        _
    $region12: #{fce_loss_forward.4} parent=5 // pred_fallthru
      _
    %p203 = scmp.lt.s32.totalorder %s12, 2
    // Predicated region
    $region17: #{fce_loss_forward.4} parent=5 // pred_check
      %p204 = pneg %p203
    $region18: #{fce_loss_forward.4} parent=5 // pred_check_branch
      %206 = sbr.rel (%p204) target = $region20
    $region19: #{fce_loss_forward.4} parent=5 // pred_region
      // Predicated region
      $region21: #{fce_loss_forward.4} parent=19 // pred_check
        %p207 = pneg %p46
      $region22: #{fce_loss_forward.4} parent=19 // pred_check_branch
        %209 = sbr.rel (%p207) target = $region24
      $region23: #{fce_loss_forward.4} parent=19 // pred_region
        %p210 = scmp.lt.s32.totalorder %s19, 1
        %s211 = scalar_select %p210, %s19, 1
        %p212 = scmp.lt.s32.totalorder %s20, 0
        %s213 = scalar_select %p212, %s20, 0
        %s214 = sadd.s32 %s213, %s211
        %s215 = smul.addr %s214, 4
        %s216 = scalar_lea.vmem %s0, %s215
      $region24: #{fce_loss_forward.4} parent=19 // pred_fallthru
        _
      // Predicated region
      $region25: #{fce_loss_forward.4} parent=19 // pred_check
        %p217 = pneg %p74
      $region26: #{fce_loss_forward.4} parent=19 // pred_check_branch
        %219 = sbr.rel (%p217) target = $region28
      $region27: #{fce_loss_forward.4} parent=19 // pred_region
        %p220 = scmp.lt.s32.totalorder %s19, 1
        %s221 = scalar_select %p220, %s19, 1
        %p222 = scmp.lt.s32.totalorder %s20, 0
        %s223 = scalar_select %p222, %s20, 0
        %s224 = smul.addr %s221, 2
        %s225 = sadd.s32 %s223, %s224
        %s226 = smul.addr %s225, 8
        %s227 = scalar_lea.vmem %s1, %s226
      $region28: #{fce_loss_forward.4} parent=19 // pred_fallthru
        _
      // Predicated region
      $region29: #{fce_loss_forward.4} parent=19 // pred_check
        %p228 = pneg %p102
      $region30: #{fce_loss_forward.4} parent=19 // pred_check_branch
        %230 = sbr.rel (%p228) target = $region32
      $region31: #{fce_loss_forward.4} parent=19 // pred_region
        %p231 = scmp.lt.s32.totalorder %s19, 1
        %s232 = scalar_select %p231, %s19, 1
        %p233 = scmp.lt.s32.totalorder %s20, 0
        %s234 = scalar_select %p233, %s20, 0
        %s235 = smul.addr %s232, 2
        %s236 = sadd.s32 %s234, %s235
        %s237 = smul.addr %s236, 8
        %s238 = scalar_lea.vmem %s2, %s237
      $region32: #{fce_loss_forward.4} parent=19 // pred_fallthru
        _
    $region20: #{fce_loss_forward.4} parent=5 // pred_fallthru
      _
    %p239 = scmp.le.s32.totalorder 1, %s12
    %p240 = scmp.lt.s32.totalorder %s12, 3
    %p241 = pnand %p239, %p240
    %p242 = pneg %p241
    // Predicated region
    $region33: #{fce_loss_forward.4} parent=5 // pred_check
      _
    $region34: #{fce_loss_forward.4} parent=5 // pred_check_branch
      %244 = sbr.rel (%p241) target = $region36
    $region35: #{fce_loss_forward.4} parent=5 // pred_region
      %s245 = ssub.s32 %s12, 1
      %p246 = scmp.lt.s32.totalorder %s21, 1
      %s247 = scalar_select %p246, %s21, 1
      %p248 = scmp.lt.s32.totalorder %s22, 0
      %s249 = scalar_select %p248, %s22, 0
      %s250 = sadd.s32 %s249, %s247
      %s251 = smul.addr %s250, 4
      %s252 = scalar_lea.vmem %s0, %s251
      %p253 = pneg %p52
      %p254 = pneg %p49
      %p255 = scmp.lt.s32.totalorder %s21, 1
      %s256 = scalar_select %p255, %s21, 1
      %p257 = scmp.lt.s32.totalorder %s22, 0
      %s258 = scalar_select %p257, %s22, 0
      %s259 = smul.addr %s256, 2
      %s260 = sadd.s32 %s258, %s259
      %s261 = smul.addr %s260, 8
      %s262 = scalar_lea.vmem %s1, %s261
      %p263 = pneg %p80
      %p264 = pneg %p77
      %p265 = scmp.lt.s32.totalorder %s21, 1
      %s266 = scalar_select %p265, %s21, 1
      %p267 = scmp.lt.s32.totalorder %s22, 0
      %s268 = scalar_select %p267, %s22, 0
      %s269 = smul.addr %s266, 2
      %s270 = sadd.s32 %s268, %s269
      %s271 = smul.addr %s270, 8
      %s272 = scalar_lea.vmem %s2, %s271
      %p273 = pneg %p108
      %p274 = pneg %p105
      %p275 = pneg %p129
      %p276 = pneg %p126
      %p277 = pneg %p157
      %p278 = pneg %p154
      %p279 = scmp.lt.s32.totalorder %s21, 1
      %s280 = scalar_select %p279, %s21, 1
      %p281 = scmp.lt.s32.totalorder %s22, 0
      %s282 = scalar_select %p281, %s22, 0
      %s283 = sadd.s32 %s282, %s280
      %s284 = scalar_lea.vmem %s4, %s283
      %p285 = pneg %p185
      %p286 = pneg %p182
      %p287 = scmp.lt.s32.totalorder %s21, 1
      %s288 = scalar_select %p287, %s21, 1
      %p289 = scmp.lt.s32.totalorder %s22, 0
      %s290 = scalar_select %p289, %s22, 0
      %s291 = sadd.s32 %s290, %s288
      %s292 = smul.addr %s291, 8
      %s293 = scalar_lea.vmem %s5, %s292
      %p294 = scmp.lt.s32.totalorder %s21, 1
      %s295 = scalar_select %p294, %s21, 1
      %p296 = scmp.lt.s32.totalorder %s22, 0
      %s297 = scalar_select %p296, %s22, 0
      %s298 = sadd.s32 %s297, %s295
      %s299 = smul.addr %s298, 4
      %s300 = scalar_lea.vmem %s0, %s299
      %p301 = scmp.lt.s32.totalorder %s21, 1
      %s302 = scalar_select %p301, %s21, 1
      %p303 = scmp.lt.s32.totalorder %s22, 0
      %s304 = scalar_select %p303, %s22, 0
      %s305 = smul.addr %s302, 2
      %s306 = sadd.s32 %s304, %s305
      %s307 = smul.addr %s306, 8
      %s308 = scalar_lea.vmem %s1, %s307
      %p309 = scmp.lt.s32.totalorder %s21, 1
      %s310 = scalar_select %p309, %s21, 1
      %p311 = scmp.lt.s32.totalorder %s22, 0
      %s312 = scalar_select %p311, %s22, 0
      %s313 = smul.addr %s310, 2
      %s314 = sadd.s32 %s312, %s313
      %s315 = smul.addr %s314, 8
      %s316 = scalar_lea.vmem %s2, %s315
      %p317 = scmp.lt.s32.totalorder %s21, 1
      %s318 = scalar_select %p317, %s21, 1
      %p319 = scmp.lt.s32.totalorder %s22, 0
      %s320 = scalar_select %p319, %s22, 0
      %s321 = sadd.s32 %s320, %s318
      %s322 = scalar_lea.vmem %s4, %s321
      %p323 = scmp.lt.s32.totalorder %s21, 1
      %s324 = scalar_select %p323, %s21, 1
      %p325 = scmp.lt.s32.totalorder %s22, 0
      %s326 = scalar_select %p325, %s22, 0
      %s327 = sadd.s32 %s326, %s324
      %s328 = smul.addr %s327, 8
      %s329 = scalar_lea.vmem %s5, %s328
      %v330 = vld [vmem:[%s300] sm:$0xf]
      %v331 = vld [vmem:[%s308] sm:$0xff]
      %v332 = vld [vmem:[%s308 + $0x8] sm:$0x3]
      %v333 = vld [vmem:[%s316] sm:$0xff]
      %v334 = vld [vmem:[%s316 + $0x8] sm:$0x1f]
      %v335 = vld [vmem:[%s3] sm:$0xff]
      %v336 = vld [vmem:[%s3 + $0x8] sm:$0xff]
      %v337 = vld [vmem:[%s3 + $0x10] sm:$0xff]
      %v338 = vld [vmem:[%s3 + $0x18] sm:$0xff]
      %v340 = vrot.slane %v330, 1
      %v342 = vmax.f32 %v330, %v340
      %v343 = vsub.f32 %v330, %v342
      %v344 = vmul.f32 %v343, 1.442695
      %v345 = vpow.pop %v344
      %v347 = vrot.slane %v342, 7
      %v349 = vsub.f32 %v330, %v347
      %v350 = vmul.f32 %v349, 1.442695
      %v351 = vpow.pop %v350
      %v353 = vrot.slane %v351, 1
      %v355 = vadd.f32 %v345, %v353
      %v356 = vlog2.pop %v355
      %v357 = vmul.f32 %v356, 0.6931472
      %v358 = vadd.f32 %v342, %v357
      %vm359 = vcmp.gt.f32.partialorder %v333, 0.5
      %v360 = vsel %vm359, %v340, %v330
      %v361 = vsub.f32 %v358, %v360
      %v362 = vrot.slane %v330, 2
      %v364 = vsel %vm359, %v362, %v340
      %v366 = vrot.slane %v364, 7
      %v368 = vsub.f32 %v358, %v366
      %vm371 = vcmask 1044480
      %v372 = vrot.slane %v333, 3
      %v373 = vrot.slane %v334, 3
      %v374 = vsel %vm371, %v372, %v373
      %v377 = vsub.f32 %v331, %v374
      %v378 = vsub.f32 %v332, %v373
      %vm379 = vcmask 80896
      %v381 = vsel %vm379, %v335, 0
      %v384 = vsel %vm379, %v336, 0
      %v387 = vsel %vm379, %v337, 0
      %v390 = vsel %vm379, %v338, 0
      %vm392 = vcmask 1041408
      %v394 = vsel %vm392, %v378, 0
      %396 = vmatprep.subr.mxu0 0.0
      %397 = vmatpush1.msra.mxu0 %v377
      %398 = vmatprep.subr.mxu0 0.0
      %399 = vmatpush1.msra.mxu0 %v394
      %400 = vmatprep.subr.mxu0 0.0
      %401 = vmatpush1.msra.mxu0 0.0
      %402 = vmatprep.subr.mxu0 0.0
      %403 = vmatpush1.msra.mxu0 0.0
      %404 = vmatprep.subr.mxu0 0.0
      %405 = vmatpush1.msra.mxu0 0.0
      %406 = vmatprep.subr.mxu0 0.0
      %407 = vmatpush1.msra.mxu0 0.0
      %408 = vmatprep.subr.mxu0 0.0
      %409 = vmatpush1.msra.mxu0 0.0
      %410 = vmatprep.subr.mxu0 0.0
      %411 = vmatpush1.msra.mxu0 0.0
      %412 = vmatprep.subr.mxu0 0.0
      %413 = vmatpush1.msra.mxu0 0.0
      %414 = vmatprep.subr.mxu0 0.0
      %415 = vmatpush1.msra.mxu0 0.0
      %416 = vmatprep.subr.mxu0 0.0
      %417 = vmatpush1.msra.mxu0 0.0
      %418 = vmatprep.subr.mxu0 0.0
      %419 = vmatpush1.msra.mxu0 0.0
      %420 = vmatprep.subr.mxu0 0.0
      %421 = vmatpush1.msra.mxu0 0.0
      %422 = vmatprep.subr.mxu0 0.0
      %423 = vmatpush1.msra.mxu0 0.0
      %424 = vmatprep.subr.mxu0 0.0
      %425 = vmatpush1.msra.mxu0 0.0
      %426 = vmatprep.subr.mxu0 0.0
      %427 = vmatpush1.msra.mxu0 0.0
      %428 = vmatprep.subr.mxu0 0.0
      %429 = vmatpush1.msra.mxu0 0.0
      %430 = vmatprep.subr.mxu0 0.0
      %431 = vmatpush1.msra.mxu0 0.0
      %432 = vmatprep.subr.mxu0 0.0
      %433 = vmatpush1.msra.mxu0 0.0
      %434 = vmatprep.subr.mxu0 0.0
      %435 = vmatpush1.msra.mxu0 0.0
      %436 = vmatprep.subr.mxu0 0.0
      %437 = vmatpush1.msra.mxu0 0.0
      %438 = vmatprep.subr.mxu0 0.0
      %439 = vmatpush1.msra.mxu0 0.0
      %440 = vmatprep.subr.mxu0 0.0
      %441 = vmatpush1.msra.mxu0 0.0
      %442 = vmatprep.subr.mxu0 0.0
      %443 = vmatpush1.msra.mxu0 0.0
      %444 = vmatprep.subr.mxu0 0.0
      %445 = vmatpush1.msra.mxu0 0.0
      %446 = vmatprep.subr.mxu0 0.0
      %447 = vmatpush1.msra.mxu0 0.0
      %448 = vmatprep.subr.mxu0 0.0
      %449 = vmatpush1.msra.mxu0 0.0
      %450 = vmatprep.subr.mxu0 0.0
      %451 = vmatpush1.msra.mxu0 0.0
      %452 = vmatprep.subr.mxu0 0.0
      %453 = vmatpush1.msra.mxu0 0.0
      %454 = vmatprep.subr.mxu0 0.0
      %455 = vmatpush1.msra.mxu0 0.0
      %456 = vmatprep.subr.mxu0 0.0
      %457 = vmatpush1.msra.mxu0 0.0
      %458 = vmatprep.subr.mxu0 0.0
      %459 = vmatpush1.msra.mxu0 0.0
      %460 = vmatprep.mubr.f32.mxu0 0.0
      %461 = vmatmul.mubr.f32.gmra.mrb[0].mxu0 %v381
      %v462 = vpop.f32.mrb[0].mxu0
      %v463 = vadd.f32 0.0, %v462
      %v464 = vpop.f32.mrb[0].mxu0
      %465 = vmatprep.mubr.f32.mxu0 0.0
      %466 = vmatmul.mubr.f32.gmra.mrb[0].mxu0 %v384
      %v467 = vpop.f32.mrb[0].mxu0
      %v468 = vadd.f32 0.0, %v467
      %v469 = vpop.f32.mrb[0].mxu0
      %470 = vmatprep.mubr.f32.mxu0 0.0
      %471 = vmatmul.mubr.f32.gmra.mrb[0].mxu0 %v387
      %v472 = vpop.f32.mrb[0].mxu0
      %v473 = vadd.f32 0.0, %v472
      %v474 = vpop.f32.mrb[0].mxu0
      %475 = vmatprep.mubr.f32.mxu0 0.0
      %476 = vmatmul.mubr.f32.gmra.mrb[0].mxu0 %v390
      %v477 = vpop.f32.mrb[0].mxu0
      %v478 = vadd.f32 0.0, %v477
      %v479 = vpop.f32.mrb[0].mxu0
      %480 = vdwg.mxu0
      %v481 = vand.u32 2147483647, %v463
      %v482 = vand.u32 2147483647, %v468
      %v483 = vand.u32 2147483647, %v473
      %v484 = vand.u32 2147483647, %v478
      %vm485 = vcmp.lt.f32.partialorder %v481, 1.0
      %vm486 = vcmp.lt.f32.partialorder %v482, 1.0
      %vm487 = vcmp.lt.f32.partialorder %v483, 1.0
      %vm488 = vcmp.lt.f32.partialorder %v484, 1.0
      %v489 = vmul.f32 %v463, 0.5
      %v490 = vmul.f32 %v468, 0.5
      %v491 = vmul.f32 %v473, 0.5
      %v492 = vmul.f32 %v478, 0.5
      %v493 = vmul.f32 %v489, %v463
      %v494 = vmul.f32 %v490, %v468
      %v495 = vmul.f32 %v491, %v473
      %v496 = vmul.f32 %v492, %v478
      %v497 = vsub.f32 %v481, 0.5
      %v498 = vsub.f32 %v482, 0.5
      %v499 = vsub.f32 %v483, 0.5
      %v500 = vsub.f32 %v484, 0.5
      %v501 = vsel %vm485, %v493, %v497
      %v502 = vsel %vm486, %v494, %v498
      %v503 = vsel %vm487, %v495, %v499
      %v504 = vsel %vm488, %v496, %v500
      %vm505 = vcmask 523264
      %v506 = vsel %vm505, %v501, 0.0
      %v507 = vsel %vm505, %v502, 0.0
      %v508 = vadd.f32 %v506, %v507
      %v509 = vrot.slane %v508, 4
      %v510 = vadd.f32 %v508, %v509
      %v511 = vrot.slane %v510, 2
      %v512 = vadd.f32 %v510, %v511
      %v513 = vrot.slane %v512, 1
      %v514 = vadd.f32 %v512, %v513
      %v515 = vsel %vm505, %v503, 0.0
      %v516 = vsel %vm505, %v504, 0.0
      %v517 = vadd.f32 %v515, %v516
      %v518 = vrot.slane %v517, 4
      %v519 = vadd.f32 %v517, %v518
      %v520 = vrot.slane %v519, 2
      %v521 = vadd.f32 %v519, %v520
      %v522 = vrot.slane %v521, 1
      %v523 = vadd.f32 %v521, %v522
      %v524 = vrot.slane %v333, 1
      %v526 = vadd.f32 %v333, %v524
      %v527 = vmul.f32 %v526, 0.5
      %v528 = vmul.f32 %v527, %v514
      %v529 = vmul.f32 %v527, %v523
      %v530 = vrot.slane %v333, 2
      %v532 = vmul.f32 %v333, %v530
      %v533 = vsub.f32 1.0, %v333
      %v534 = vmul.f32 %v533, %v530
      %v535 = vmul.f32 %v534, %v361
      %vm536 = vcmask 516096
      %537 = vst.msk [vmem:[%s322] sm:$0x1] %vm536, %v535
      %v538 = vmul.f32 %v532, %v361
      %v540 = vrot.slane %v368, 2
      %v542 = vmul.f32 %v532, %v540
      %v543 = vsub.f32 1.0, %v532
      %v544 = vmul.f32 %v543, %v540
      %v545 = vmul.f32 %v532, %v528
      %v546 = vmul.f32 %v532, %v529
      %v548 = vrot.slane %v538, 7
      %v551 = vrot.slane %v534, 6
      %v554 = vrot.slane %v542, 5
      %v557 = vrot.slane %v544, 4
      %v560 = vrot.slane %v545, 2
      %v563 = vrot.slane %v546, 1
      %vm565 = vcmask 1040384
      %v566 = vsel %vm565, %v532, %v548
      %v567 = vsel %vm392, %v566, %v551
      %vm568 = vcmask 1042432
      %v569 = vsel %vm568, %v567, %v554
      %vm570 = vcmask 1043456
      %v571 = vsel %vm570, %v569, %v557
      %v572 = vsel %vm371, %v571, 1.0
      %vm573 = vcmask 1045504
      %v574 = vsel %vm573, %v572, %v560
      %vm575 = vcmask 1046528
      %v576 = vsel %vm575, %v574, %v563
      %v577 = vsel %vm505, %v576, 0.0
      %578 = vadd.xlane.f32.xlu0 %v577
      %v579 = vpop.xlane.xlu0 %578
      %580 = vst [vmem:[%s329] sm:$0xff] %v579
      %p581 = scmp.lt.s32.totalorder %s21, 1
      %s582 = scalar_select %p581, %s21, 1
      %p583 = scmp.lt.s32.totalorder %s22, 0
      %s584 = scalar_select %p583, %s22, 0
      %s585 = sadd.s32 %s584, %s582
      %s586 = scalar_lea.vmem %s4, %s585
      %p587 = scmp.lt.s32.totalorder %s21, 1
      %s588 = scalar_select %p587, %s21, 1
      %p589 = scmp.lt.s32.totalorder %s22, 0
      %s590 = scalar_select %p589, %s22, 0
      %s591 = sadd.s32 %s590, %s588
      %s592 = smul.addr %s591, 8
      %s593 = scalar_lea.vmem %s5, %s592
      // Predicated region
      $region37: #{fce_loss_forward.4} parent=35 // pred_check
        %p594 = pneg %p154
      $region38: #{fce_loss_forward.4} parent=35 // pred_check_branch
        %596 = sbr.rel (%p594) target = $region40
      $region39: #{fce_loss_forward.4} parent=35 // pred_region
        _
      $region40: #{fce_loss_forward.4} parent=35 // pred_fallthru
        _
      // Predicated region
      $region41: #{fce_loss_forward.4} parent=35 // pred_check
        %p597 = pneg %p182
      $region42: #{fce_loss_forward.4} parent=35 // pred_check_branch
        %599 = sbr.rel (%p597) target = $region44
      $region43: #{fce_loss_forward.4} parent=35 // pred_region
        _
      $region44: #{fce_loss_forward.4} parent=35 // pred_fallthru
        _
    $region36: #{fce_loss_forward.4} parent=5 // pred_fallthru
      _
    %p600 = scmp.le.s32.totalorder 2, %s12
    // Predicated region
    $region45: #{fce_loss_forward.4} parent=5 // pred_check
      %p601 = pneg %p600
    $region46: #{fce_loss_forward.4} parent=5 // pred_check_branch
      %603 = sbr.rel (%p601) target = $region48
    $region47: #{fce_loss_forward.4} parent=5 // pred_region
      %s604 = ssub.s32 %s12, 2
      // Predicated region
      $region49: #{fce_loss_forward.4} parent=47 // pred_check
        %p605 = pneg %p160
      $region50: #{fce_loss_forward.4} parent=47 // pred_check_branch
        %607 = sbr.rel (%p605) target = $region52
      $region51: #{fce_loss_forward.4} parent=47 // pred_region
        %p608 = scmp.lt.s32.totalorder %s23, 1
        %s609 = scalar_select %p608, %s23, 1
        %p610 = scmp.lt.s32.totalorder %s24, 0
        %s611 = scalar_select %p610, %s24, 0
        %s612 = sadd.s32 %s611, %s609
        %s613 = scalar_lea.vmem %s4, %s612
      $region52: #{fce_loss_forward.4} parent=47 // pred_fallthru
        _
      // Predicated region
      $region53: #{fce_loss_forward.4} parent=47 // pred_check
        %p614 = pneg %p188
      $region54: #{fce_loss_forward.4} parent=47 // pred_check_branch
        %616 = sbr.rel (%p614) target = $region56
      $region55: #{fce_loss_forward.4} parent=47 // pred_region
        %p617 = scmp.lt.s32.totalorder %s23, 1
        %s618 = scalar_select %p617, %s23, 1
        %p619 = scmp.lt.s32.totalorder %s24, 0
        %s620 = scalar_select %p619, %s24, 0
        %s621 = sadd.s32 %s620, %s618
        %s622 = smul.addr %s621, 8
        %s623 = scalar_lea.vmem %s5, %s622
      $region56: #{fce_loss_forward.4} parent=47 // pred_fallthru
        _
    $region48: #{fce_loss_forward.4} parent=5 // pred_fallthru
      _
  $region6: #{fce_loss_forward.4} parent=0 // loop_footer
    %s16 = sadd.s32 1, %s12
  $region7: #{fce_loss_forward.4} parent=0 // loop_footer_branch
    %11 = sbr.rel target = $region3
  $region8: #{fce_loss_forward.4} parent=0 // loop_exit
    _

// kernel: fce_loss_forward.3
$region0: #{fce_loss_forward.3}
  #allocation0 [shape = 'u32[]', space=smem, size = 0x4, offset = 0x4, fixed_abs, tag = 'smem constant byte address 0x4 - core index']
  #allocation1 [shape = 'u32[144,128]{1,0:T(1,128)}', space=vmem, size = 0x12000, scoped, tag = 'internal scratch']
  %s0 = inlined_call_operand.vmem [shape: f32[2,4,256], index: 0, kind: input, shape index: {}]
  %s1 = inlined_call_operand.vmem [shape: f32[2,10,256], index: 1, kind: input, shape index: {}]
  %s2 = inlined_call_operand.vmem [shape: f32[2,13,256], index: 2, kind: input, shape index: {}]
  %s3 = inlined_call_operand.vmem [shape: f32[32,10], index: 3, kind: input, shape index: {}]
  %s4 = inlined_call_operand.vmem [shape: f32[2,1,256], index: 4, kind: output, shape index: {0}]
  %s5 = inlined_call_operand.vmem [shape: f32[2,1,8,128], index: 5, kind: output, shape index: {1}]
  %6 = xla_tuple %s4, %s5
  %s7 = sld [smem:[#allocation0]]
  $region57: #{fce_loss_forward.3} parent=0
    _
  %s9 = ssub.s32 1, %s7
  %s10 = scalar_select 0, %s9, %s7
  loop: start=0, step=1, limit=4
  $region2: #{fce_loss_forward.3} parent=0 // loop_pre_header
    _
  $region3: #{fce_loss_forward.3} parent=0 // loop_header
    %s12 = sphi 0, %s16
    %p13 = scmp.ge.s32.totalorder %s12, 4
    %s19 = sphi 0, %s31
    %s20 = sphi 0, %s27
    %s21 = sphi 0, %s19
    %s22 = sphi 0, %s20
    %s23 = sphi 0, %s21
    %s24 = sphi 0, %s22
    %s36 = sphi 0, %s38
    %s39 = sphi 0, %s36
    %s40 = sphi 0, %s39
    %s56 = sphi 0, %s40
    %s64 = sphi 0, %s66
    %s67 = sphi 0, %s64
    %s68 = sphi 0, %s67
    %s84 = sphi 0, %s68
    %s92 = sphi 0, %s94
    %s95 = sphi 0, %s92
    %s96 = sphi 0, %s95
    %s112 = sphi 0, %s96
    %s116 = sphi 0, %s116
    %s118 = sphi 0, %s116
    %s119 = sphi 0, %s118
    %s133 = sphi 0, %s119
    %s141 = sphi 0, %s143
    %s144 = sphi 0, %s141
    %s145 = sphi 0, %s144
    %s161 = sphi 0, %s145
    %s169 = sphi 0, %s171
    %s172 = sphi 0, %s169
    %s173 = sphi 0, %s172
    %s189 = sphi 0, %s173
  $region4: #{fce_loss_forward.3} parent=0 // loop_header_branch
    %15 = sbr.rel (%p13) target = $region8
  $region5: #{fce_loss_forward.3} parent=0 // loop_body
    %s17 = ssub.s32 %s12, 1
    %s18 = ssub.s32 %s12, 2
    %s25 = sadd.s32 1, %s20
    %p26 = scmp.ge.s32.totalorder %s25, 1
    %s27 = scalar_select %p26, 0, %s25
    %s28 = sadd.s32 1, %s19
    %s29 = scalar_select %p26, %s28, %s19
    %p30 = scmp.ge.s32.totalorder %s29, 2
    %s31 = scalar_select %p30, 0, %s29
    %s32 = ssub.s32 %s19, %s31
    %s33 = ssub.s32 %s20, %s27
    %s34 = sor.u32 %s32, %s33
    %p35 = scmp.eq.s32.totalorder %s34, 0
    %s37 = sadd.s32 %s36, 1
    %s38 = scalar_select %p35, %s36, %s37
    %p41 = pneg %p35
    %p42 = scmp.eq.s32.totalorder %s12, 1
    %p43 = por %p41, %p42
    %p44 = scmp.ne.s32.totalorder %s36, %s39
    %p45 = scmp.eq.s32.totalorder %s12, 0
    %p46 = por %p44, %p45
    %p47 = scmp.ne.s32.totalorder %s36, %s39
    %p48 = scmp.eq.s32.totalorder %s17, 1
    %p49 = por %p47, %p48
    %p50 = scmp.ne.s32.totalorder %s39, %s40
    %p51 = scmp.eq.s32.totalorder %s17, 0
    %p52 = por %p50, %p51
    %p53 = scmp.ne.s32.totalorder %s39, %s40
    %p54 = scmp.eq.s32.totalorder %s18, 1
    %p55 = por %p53, %p54
    %p57 = scmp.ne.s32.totalorder %s40, %s56
    %p58 = scmp.eq.s32.totalorder %s18, 0
    %p59 = por %p57, %p58
    %s60 = ssub.s32 %s19, %s31
    %s61 = ssub.s32 %s20, %s27
    %s62 = sor.u32 %s60, %s61
    %p63 = scmp.eq.s32.totalorder %s62, 0
    %s65 = sadd.s32 %s64, 1
    %s66 = scalar_select %p63, %s64, %s65
    %p69 = pneg %p63
    %p70 = scmp.eq.s32.totalorder %s12, 1
    %p71 = por %p69, %p70
    %p72 = scmp.ne.s32.totalorder %s64, %s67
    %p73 = scmp.eq.s32.totalorder %s12, 0
    %p74 = por %p72, %p73
    %p75 = scmp.ne.s32.totalorder %s64, %s67
    %p76 = scmp.eq.s32.totalorder %s17, 1
    %p77 = por %p75, %p76
    %p78 = scmp.ne.s32.totalorder %s67, %s68
    %p79 = scmp.eq.s32.totalorder %s17, 0
    %p80 = por %p78, %p79
    %p81 = scmp.ne.s32.totalorder %s67, %s68
    %p82 = scmp.eq.s32.totalorder %s18, 1
    %p83 = por %p81, %p82
    %p85 = scmp.ne.s32.totalorder %s68, %s84
    %p86 = scmp.eq.s32.totalorder %s18, 0
    %p87 = por %p85, %p86
    %s88 = ssub.s32 %s19, %s31
    %s89 = ssub.s32 %s20, %s27
    %s90 = sor.u32 %s88, %s89
    %p91 = scmp.eq.s32.totalorder %s90, 0
    %s93 = sadd.s32 %s92, 1
    %s94 = scalar_select %p91, %s92, %s93
    %p97 = pneg %p91
    %p98 = scmp.eq.s32.totalorder %s12, 1
    %p99 = por %p97, %p98
    %p100 = scmp.ne.s32.totalorder %s92, %s95
    %p101 = scmp.eq.s32.totalorder %s12, 0
    %p102 = por %p100, %p101
    %p103 = scmp.ne.s32.totalorder %s92, %s95
    %p104 = scmp.eq.s32.totalorder %s17, 1
    %p105 = por %p103, %p104
    %p106 = scmp.ne.s32.totalorder %s95, %s96
    %p107 = scmp.eq.s32.totalorder %s17, 0
    %p108 = por %p106, %p107
    %p109 = scmp.ne.s32.totalorder %s95, %s96
    %p110 = scmp.eq.s32.totalorder %s18, 1
    %p111 = por %p109, %p110
    %p113 = scmp.ne.s32.totalorder %s96, %s112
    %p114 = scmp.eq.s32.totalorder %s18, 0
    %p115 = por %p113, %p114
    %s117 = sadd.s32 %s116, 1
    %p120 = scmp.eq.s32.totalorder %s12, 1
    %p121 = scmp.ne.s32.totalorder %s116, %s118
    %p122 = scmp.eq.s32.totalorder %s12, 0
    %p123 = por %p121, %p122
    %p124 = scmp.ne.s32.totalorder %s116, %s118
    %p125 = scmp.eq.s32.totalorder %s17, 1
    %p126 = por %p124, %p125
    %p127 = scmp.ne.s32.totalorder %s118, %s119
    %p128 = scmp.eq.s32.totalorder %s17, 0
    %p129 = por %p127, %p128
    %p130 = scmp.ne.s32.totalorder %s118, %s119
    %p131 = scmp.eq.s32.totalorder %s18, 1
    %p132 = por %p130, %p131
    %p134 = scmp.ne.s32.totalorder %s119, %s133
    %p135 = scmp.eq.s32.totalorder %s18, 0
    %p136 = por %p134, %p135
    %s137 = ssub.s32 %s19, %s31
    %s138 = ssub.s32 %s20, %s27
    %s139 = sor.u32 %s137, %s138
    %p140 = scmp.eq.s32.totalorder %s139, 0
    %s142 = sadd.s32 %s141, 1
    %s143 = scalar_select %p140, %s141, %s142
    %p146 = pneg %p140
    %p147 = scmp.eq.s32.totalorder %s12, 1
    %p148 = por %p146, %p147
    %p149 = scmp.ne.s32.totalorder %s141, %s144
    %p150 = scmp.eq.s32.totalorder %s12, 0
    %p151 = por %p149, %p150
    %p152 = scmp.ne.s32.totalorder %s141, %s144
    %p153 = scmp.eq.s32.totalorder %s17, 1
    %p154 = por %p152, %p153
    %p155 = scmp.ne.s32.totalorder %s144, %s145
    %p156 = scmp.eq.s32.totalorder %s17, 0
    %p157 = por %p155, %p156
    %p158 = scmp.ne.s32.totalorder %s144, %s145
    %p159 = scmp.eq.s32.totalorder %s18, 1
    %p160 = por %p158, %p159
    %p162 = scmp.ne.s32.totalorder %s145, %s161
    %p163 = scmp.eq.s32.totalorder %s18, 0
    %p164 = por %p162, %p163
    %s165 = ssub.s32 %s19, %s31
    %s166 = ssub.s32 %s20, %s27
    %s167 = sor.u32 %s165, %s166
    %p168 = scmp.eq.s32.totalorder %s167, 0
    %s170 = sadd.s32 %s169, 1
    %s171 = scalar_select %p168, %s169, %s170
    %p174 = pneg %p168
    %p175 = scmp.eq.s32.totalorder %s12, 1
    %p176 = por %p174, %p175
    %p177 = scmp.ne.s32.totalorder %s169, %s172
    %p178 = scmp.eq.s32.totalorder %s12, 0
    %p179 = por %p177, %p178
    %p180 = scmp.ne.s32.totalorder %s169, %s172
    %p181 = scmp.eq.s32.totalorder %s17, 1
    %p182 = por %p180, %p181
    %p183 = scmp.ne.s32.totalorder %s172, %s173
    %p184 = scmp.eq.s32.totalorder %s17, 0
    %p185 = por %p183, %p184
    %p186 = scmp.ne.s32.totalorder %s172, %s173
    %p187 = scmp.eq.s32.totalorder %s18, 1
    %p188 = por %p186, %p187
    %p190 = scmp.ne.s32.totalorder %s173, %s189
    %p191 = scmp.eq.s32.totalorder %s18, 0
    %p192 = por %p190, %p191
    %p193 = scmp.le.s32.totalorder 1, %s12
    %p194 = scmp.lt.s32.totalorder %s12, 3
    %p195 = pnand %p193, %p194
    %p196 = pneg %p195
    // Predicated region
    $region9: #{fce_loss_forward.3} parent=5 // pred_check
      _
    $region10: #{fce_loss_forward.3} parent=5 // pred_check_branch
      %198 = sbr.rel (%p195) target = $region12
    $region11: #{fce_loss_forward.3} parent=5 // pred_region
      %s199 = ssub.s32 %s12, 1
      // Predicated region
      $region13: #{fce_loss_forward.3} parent=11 // pred_check
        %p200 = pneg %p129
      $region14: #{fce_loss_forward.3} parent=11 // pred_check_branch
        %202 = sbr.rel (%p200) target = $region16
      $region15: #{fce_loss_forward.3} parent=11 // pred_region
        _
      $region16: #{fce_loss_forward.3} parent=11 // pred_fallthru
        _
    $region12: #{fce_loss_forward.3} parent=5 // pred_fallthru
      _
    %p203 = scmp.lt.s32.totalorder %s12, 2
    // Predicated region
    $region17: #{fce_loss_forward.3} parent=5 // pred_check
      %p204 = pneg %p203
    $region18: #{fce_loss_forward.3} parent=5 // pred_check_branch
      %206 = sbr.rel (%p204) target = $region20
    $region19: #{fce_loss_forward.3} parent=5 // pred_region
      // Predicated region
      $region21: #{fce_loss_forward.3} parent=19 // pred_check
        %p207 = pneg %p46
      $region22: #{fce_loss_forward.3} parent=19 // pred_check_branch
        %209 = sbr.rel (%p207) target = $region24
      $region23: #{fce_loss_forward.3} parent=19 // pred_region
        %s210 = smul.u32 2, %s20
        %p211 = scmp.lt.s32.totalorder %s19, 1
        %s212 = scalar_select %p211, %s19, 1
        %p213 = scmp.lt.s32.totalorder %s210, 1
        %s214 = scalar_select %p213, %s210, 1
        %s215 = smul.addr %s212, 2
        %s216 = sadd.s32 %s214, %s215
        %s217 = smul.addr %s216, 4
        %s218 = scalar_lea.vmem %s0, %s217
        %s219 = smul.u32 2, %s20
      $region24: #{fce_loss_forward.3} parent=19 // pred_fallthru
        _
      // Predicated region
      $region25: #{fce_loss_forward.3} parent=19 // pred_check
        %p220 = pneg %p74
      $region26: #{fce_loss_forward.3} parent=19 // pred_check_branch
        %222 = sbr.rel (%p220) target = $region28
      $region27: #{fce_loss_forward.3} parent=19 // pred_region
        %s223 = smul.u32 2, %s20
        %p224 = scmp.lt.s32.totalorder %s19, 1
        %s225 = scalar_select %p224, %s19, 1
        %p226 = scmp.lt.s32.totalorder %s223, 1
        %s227 = scalar_select %p226, %s223, 1
        %s228 = smul.addr %s225, 4
        %s229 = sadd.s32 %s227, %s228
        %s230 = smul.addr %s229, 8
        %s231 = scalar_lea.vmem %s1, %s230
        %s232 = smul.u32 2, %s20
      $region28: #{fce_loss_forward.3} parent=19 // pred_fallthru
        _
      // Predicated region
      $region29: #{fce_loss_forward.3} parent=19 // pred_check
        %p233 = pneg %p102
      $region30: #{fce_loss_forward.3} parent=19 // pred_check_branch
        %235 = sbr.rel (%p233) target = $region32
      $region31: #{fce_loss_forward.3} parent=19 // pred_region
        %s236 = smul.u32 2, %s20
        %p237 = scmp.lt.s32.totalorder %s19, 1
        %s238 = scalar_select %p237, %s19, 1
        %p239 = scmp.lt.s32.totalorder %s236, 1
        %s240 = scalar_select %p239, %s236, 1
        %s241 = smul.addr %s238, 4
        %s242 = sadd.s32 %s240, %s241
        %s243 = smul.addr %s242, 8
        %s244 = scalar_lea.vmem %s2, %s243
        %s245 = smul.u32 2, %s20
      $region32: #{fce_loss_forward.3} parent=19 // pred_fallthru
        _
    $region20: #{fce_loss_forward.3} parent=5 // pred_fallthru
      _
    %p246 = scmp.le.s32.totalorder 1, %s12
    %p247 = scmp.lt.s32.totalorder %s12, 3
    %p248 = pnand %p246, %p247
    %p249 = pneg %p248
    // Predicated region
    $region33: #{fce_loss_forward.3} parent=5 // pred_check
      _
    $region34: #{fce_loss_forward.3} parent=5 // pred_check_branch
      %251 = sbr.rel (%p248) target = $region36
    $region35: #{fce_loss_forward.3} parent=5 // pred_region
      %s252 = ssub.s32 %s12, 1
      %s253 = smul.u32 2, %s22
      %p254 = scmp.lt.s32.totalorder %s21, 1
      %s255 = scalar_select %p254, %s21, 1
      %p256 = scmp.lt.s32.totalorder %s253, 1
      %s257 = scalar_select %p256, %s253, 1
      %s258 = smul.addr %s255, 2
      %s259 = sadd.s32 %s257, %s258
      %s260 = smul.addr %s259, 4
      %s261 = scalar_lea.vmem %s0, %s260
      %p262 = pneg %p52
      %p263 = pneg %p49
      %s264 = smul.u32 2, %s22
      %p265 = scmp.lt.s32.totalorder %s21, 1
      %s266 = scalar_select %p265, %s21, 1
      %p267 = scmp.lt.s32.totalorder %s264, 1
      %s268 = scalar_select %p267, %s264, 1
      %s269 = smul.addr %s266, 4
      %s270 = sadd.s32 %s268, %s269
      %s271 = smul.addr %s270, 8
      %s272 = scalar_lea.vmem %s1, %s271
      %p273 = pneg %p80
      %p274 = pneg %p77
      %s275 = smul.u32 2, %s22
      %p276 = scmp.lt.s32.totalorder %s21, 1
      %s277 = scalar_select %p276, %s21, 1
      %p278 = scmp.lt.s32.totalorder %s275, 1
      %s279 = scalar_select %p278, %s275, 1
      %s280 = smul.addr %s277, 4
      %s281 = sadd.s32 %s279, %s280
      %s282 = smul.addr %s281, 8
      %s283 = scalar_lea.vmem %s2, %s282
      %p284 = pneg %p108
      %p285 = pneg %p105
      %p286 = pneg %p129
      %p287 = pneg %p126
      %p288 = pneg %p157
      %p289 = pneg %p154
      %s290 = smul.u32 2, %s22
      %p291 = scmp.lt.s32.totalorder %s21, 1
      %s292 = scalar_select %p291, %s21, 1
      %p293 = scmp.lt.s32.totalorder %s290, 1
      %s294 = scalar_select %p293, %s290, 1
      %s295 = smul.addr %s292, 2
      %s296 = sadd.s32 %s294, %s295
      %s297 = scalar_lea.vmem %s4, %s296
      %p298 = pneg %p185
      %p299 = pneg %p182
      %p300 = scmp.lt.s32.totalorder %s21, 1
      %s301 = scalar_select %p300, %s21, 1
      %p302 = scmp.lt.s32.totalorder %s22, 0
      %s303 = scalar_select %p302, %s22, 0
      %s304 = sadd.s32 %s303, %s301
      %s305 = smul.addr %s304, 8
      %s306 = scalar_lea.vmem %s5, %s305
      %s307 = smul.u32 2, %s22
      %p308 = scmp.lt.s32.totalorder %s21, 1
      %s309 = scalar_select %p308, %s21, 1
      %p310 = scmp.lt.s32.totalorder %s307, 1
      %s311 = scalar_select %p310, %s307, 1
      %s312 = smul.addr %s309, 2
      %s313 = sadd.s32 %s311, %s312
      %s314 = smul.addr %s313, 4
      %s315 = scalar_lea.vmem %s0, %s314
      %s316 = smul.u32 2, %s22
      %s317 = smul.u32 2, %s22
      %p318 = scmp.lt.s32.totalorder %s21, 1
      %s319 = scalar_select %p318, %s21, 1
      %p320 = scmp.lt.s32.totalorder %s317, 1
      %s321 = scalar_select %p320, %s317, 1
      %s322 = smul.addr %s319, 4
      %s323 = sadd.s32 %s321, %s322
      %s324 = smul.addr %s323, 8
      %s325 = scalar_lea.vmem %s1, %s324
      %s326 = smul.u32 2, %s22
      %s327 = smul.u32 2, %s22
      %p328 = scmp.lt.s32.totalorder %s21, 1
      %s329 = scalar_select %p328, %s21, 1
      %p330 = scmp.lt.s32.totalorder %s327, 1
      %s331 = scalar_select %p330, %s327, 1
      %s332 = smul.addr %s329, 4
      %s333 = sadd.s32 %s331, %s332
      %s334 = smul.addr %s333, 8
      %s335 = scalar_lea.vmem %s2, %s334
      %s336 = smul.u32 2, %s22
      %s337 = smul.u32 2, %s22
      %p338 = scmp.lt.s32.totalorder %s21, 1
      %s339 = scalar_select %p338, %s21, 1
      %p340 = scmp.lt.s32.totalorder %s337, 1
      %s341 = scalar_select %p340, %s337, 1
      %s342 = smul.addr %s339, 2
      %s343 = sadd.s32 %s341, %s342
      %s344 = scalar_lea.vmem %s4, %s343
      %s345 = smul.u32 2, %s22
      %p346 = scmp.lt.s32.totalorder %s21, 1
      %s347 = scalar_select %p346, %s21, 1
      %p348 = scmp.lt.s32.totalorder %s22, 0
      %s349 = scalar_select %p348, %s22, 0
      %s350 = sadd.s32 %s349, %s347
      %s351 = smul.addr %s350, 8
      %s352 = scalar_lea.vmem %s5, %s351
      %v353 = vld [vmem:[%s315] sm:$0xff]
      %v354 = vld [vmem:[%s325] sm:$0xff]
      %v355 = vld [vmem:[%s325 + $0x8] sm:$0xff]
      %v356 = vld [vmem:[%s325 + $0x10] sm:$0x3]
      %v357 = vld [vmem:[%s325 + $0x18] sm:$0x3]
      %v358 = vld [vmem:[%s335] sm:$0xff]
      %v359 = vld [vmem:[%s335 + $0x8] sm:$0xff]
      %v360 = vld [vmem:[%s335 + $0x10] sm:$0x1f]
      %v361 = vld [vmem:[%s335 + $0x18] sm:$0x1f]
      %v362 = vld [vmem:[%s3] sm:$0xff]
      %v363 = vld [vmem:[%s3 + $0x8] sm:$0xff]
      %v364 = vld [vmem:[%s3 + $0x10] sm:$0xff]
      %v365 = vld [vmem:[%s3 + $0x18] sm:$0xff]
      %v367 = vrot.slane %v353, 5
      %v368 = vrot.slane %v367, 4
      %v370 = vmax.f32 %v353, %v368
      %v371 = vsub.f32 %v353, %v370
      %v372 = vmul.f32 %v371, 1.442695
      %v373 = vpow.pop %v372
      %v375 = vrot.slane %v370, 7
      %v377 = vsub.f32 %v353, %v375
      %v378 = vmul.f32 %v377, 1.442695
      %v379 = vpow.pop %v378
      %v381 = vrot.slane %v379, 5
      %v382 = vrot.slane %v381, 4
      %v384 = vadd.f32 %v373, %v382
      %v385 = vlog2.pop %v384
      %v386 = vmul.f32 %v385, 0.6931472
      %v387 = vadd.f32 %v370, %v386
      %vm388 = vcmp.gt.f32.partialorder %v358, 0.5
      %vm389 = vcmp.gt.f32.partialorder %v359, 0.5
      %v390 = vlaneseq
      %v391 = vshrl.u32 %v390, 7
      %v392 = vsub.s32 1, %v391
      %v393 = vrot.slane %v353, %v392
      %v394 = vlaneseq
      %v395 = vshrl.u32 %v394, 7
      %v396 = vsub.s32 5, %v395
      %v397 = vrot.slane %v353, %v396
      %v400 = vlaneseq
      %v401 = vshrl.u32 %v400, 7
      %v402 = vsub.s32 0, %v401
      %v403 = vrot.slane %v353, %v402
      %v404 = vlaneseq
      %v405 = vshrl.u32 %v404, 7
      %v406 = vsub.s32 4, %v405
      %v407 = vrot.slane %v353, %v406
      %v410 = vsel %vm388, %v393, %v403
      %v411 = vsel %vm389, %v397, %v407
      %v414 = vcombine.low %v410, %v411
      %v416 = vsub.f32 %v387, %v414
      %v417 = vlaneseq
      %v418 = vshrl.u32 %v417, 7
      %v419 = vsub.s32 3, %v418
      %v420 = vrot.slane %v353, %v419
      %v421 = vlaneseq
      %v422 = vshrl.u32 %v421, 7
      %v423 = vsub.s32 7, %v422
      %v424 = vrot.slane %v353, %v423
      %v427 = vlaneseq
      %v428 = vshrl.u32 %v427, 7
      %v429 = vsub.s32 2, %v428
      %v430 = vrot.slane %v353, %v429
      %v431 = vlaneseq
      %v432 = vshrl.u32 %v431, 7
      %v433 = vsub.s32 6, %v432
      %v434 = vrot.slane %v353, %v433
      %v437 = vsel %vm388, %v420, %v430
      %v438 = vsel %vm389, %v424, %v434
      %v441 = vcombine.low %v437, %v438
      %v442 = vrot.slane %v441, 7
      %v444 = vsub.f32 %v387, %v442
      %vm449 = vcmask 1044480
      %v450 = vrot.slane %v358, 3
      %v451 = vrot.slane %v360, 3
      %v452 = vsel %vm449, %v450, %v451
      %v453 = vrot.slane %v359, 3
      %v454 = vrot.slane %v361, 3
      %v455 = vsel %vm449, %v453, %v454
      %v460 = vsub.f32 %v354, %v452
      %v461 = vsub.f32 %v355, %v455
      %v462 = vsub.f32 %v356, %v451
      %v463 = vsub.f32 %v357, %v454
      %vm464 = vcmask 80896
      %v466 = vsel %vm464, %v362, 0
      %v469 = vsel %vm464, %v363, 0
      %v472 = vsel %vm464, %v364, 0
      %v475 = vsel %vm464, %v365, 0
      %vm477 = vcmask 1041408
      %v479 = vsel %vm477, %v462, 0
      %v482 = vsel %vm477, %v463, 0
      %484 = vmatprep.subr.mxu0 %v461
      %485 = vmatpush1.msra.mxu0 %v460
      %486 = vmatprep.subr.mxu0 %v482
      %487 = vmatpush1.msra.mxu0 %v479
      %488 = vmatprep.subr.mxu0 0.0
      %489 = vmatpush1.msra.mxu0 0.0
      %490 = vmatprep.subr.mxu0 0.0
      %491 = vmatpush1.msra.mxu0 0.0
      %492 = vmatprep.subr.mxu0 0.0
      %493 = vmatpush1.msra.mxu0 0.0
      %494 = vmatprep.subr.mxu0 0.0
      %495 = vmatpush1.msra.mxu0 0.0
      %496 = vmatprep.subr.mxu0 0.0
      %497 = vmatpush1.msra.mxu0 0.0
      %498 = vmatprep.subr.mxu0 0.0
      %499 = vmatpush1.msra.mxu0 0.0
      %500 = vmatprep.subr.mxu0 0.0
      %501 = vmatpush1.msra.mxu0 0.0
      %502 = vmatprep.subr.mxu0 0.0
      %503 = vmatpush1.msra.mxu0 0.0
      %504 = vmatprep.subr.mxu0 0.0
      %505 = vmatpush1.msra.mxu0 0.0
      %506 = vmatprep.subr.mxu0 0.0
      %507 = vmatpush1.msra.mxu0 0.0
      %508 = vmatprep.subr.mxu0 0.0
      %509 = vmatpush1.msra.mxu0 0.0
      %510 = vmatprep.subr.mxu0 0.0
      %511 = vmatpush1.msra.mxu0 0.0
      %512 = vmatprep.subr.mxu0 0.0
      %513 = vmatpush1.msra.mxu0 0.0
      %514 = vmatprep.subr.mxu0 0.0
      %515 = vmatpush1.msra.mxu0 0.0
      %516 = vmatprep.subr.mxu0 0.0
      %517 = vmatpush1.msra.mxu0 0.0
      %518 = vmatprep.subr.mxu0 0.0
      %519 = vmatpush1.msra.mxu0 0.0
      %520 = vmatprep.subr.mxu0 0.0
      %521 = vmatpush1.msra.mxu0 0.0
      %522 = vmatprep.subr.mxu0 0.0
      %523 = vmatpush1.msra.mxu0 0.0
      %524 = vmatprep.subr.mxu0 0.0
      %525 = vmatpush1.msra.mxu0 0.0
      %526 = vmatprep.subr.mxu0 0.0
      %527 = vmatpush1.msra.mxu0 0.0
      %528 = vmatprep.subr.mxu0 0.0
      %529 = vmatpush1.msra.mxu0 0.0
      %530 = vmatprep.subr.mxu0 0.0
      %531 = vmatpush1.msra.mxu0 0.0
      %532 = vmatprep.subr.mxu0 0.0
      %533 = vmatpush1.msra.mxu0 0.0
      %534 = vmatprep.subr.mxu0 0.0
      %535 = vmatpush1.msra.mxu0 0.0
      %536 = vmatprep.subr.mxu0 0.0
      %537 = vmatpush1.msra.mxu0 0.0
      %538 = vmatprep.subr.mxu0 0.0
      %539 = vmatpush1.msra.mxu0 0.0
      %540 = vmatprep.subr.mxu0 0.0
      %541 = vmatpush1.msra.mxu0 0.0
      %542 = vmatprep.subr.mxu0 0.0
      %543 = vmatpush1.msra.mxu0 0.0
      %544 = vmatprep.subr.mxu0 0.0
      %545 = vmatpush1.msra.mxu0 0.0
      %546 = vmatprep.subr.mxu0 0.0
      %547 = vmatpush1.msra.mxu0 0.0
      %548 = vmatprep.mubr.f32.mxu0 0.0
      %549 = vmatmul.mubr.f32.gmra.mrb[0].mxu0 %v466
      %v550 = vpop.f32.mrb[0].mxu0
      %v551 = vadd.f32 0.0, %v550
      %v552 = vpop.f32.mrb[0].mxu0
      %v553 = vadd.f32 0.0, %v552
      %554 = vmatprep.mubr.f32.mxu0 0.0
      %555 = vmatmul.mubr.f32.gmra.mrb[0].mxu0 %v469
      %v556 = vpop.f32.mrb[0].mxu0
      %v557 = vadd.f32 0.0, %v556
      %v558 = vpop.f32.mrb[0].mxu0
      %v559 = vadd.f32 0.0, %v558
      %560 = vmatprep.mubr.f32.mxu0 0.0
      %561 = vmatmul.mubr.f32.gmra.mrb[0].mxu0 %v472
      %v562 = vpop.f32.mrb[0].mxu0
      %v563 = vadd.f32 0.0, %v562
      %v564 = vpop.f32.mrb[0].mxu0
      %v565 = vadd.f32 0.0, %v564
      %566 = vmatprep.mubr.f32.mxu0 0.0
      %567 = vmatmul.mubr.f32.gmra.mrb[0].mxu0 %v475
      %v568 = vpop.f32.mrb[0].mxu0
      %v569 = vadd.f32 0.0, %v568
      %v570 = vpop.f32.mrb[0].mxu0
      %v571 = vadd.f32 0.0, %v570
      %572 = vdwg.mxu0
      %v573 = vand.u32 2147483647, %v551
      %v574 = vand.u32 2147483647, %v553
      %v575 = vand.u32 2147483647, %v557
      %v576 = vand.u32 2147483647, %v559
      %v577 = vand.u32 2147483647, %v563
      %v578 = vand.u32 2147483647, %v565
      %v579 = vand.u32 2147483647, %v569
      %v580 = vand.u32 2147483647, %v571
      %vm581 = vcmp.lt.f32.partialorder %v573, 1.0
      %vm582 = vcmp.lt.f32.partialorder %v574, 1.0
      %vm583 = vcmp.lt.f32.partialorder %v575, 1.0
      %vm584 = vcmp.lt.f32.partialorder %v576, 1.0
      %vm585 = vcmp.lt.f32.partialorder %v577, 1.0
      %vm586 = vcmp.lt.f32.partialorder %v578, 1.0
      %vm587 = vcmp.lt.f32.partialorder %v579, 1.0
      %vm588 = vcmp.lt.f32.partialorder %v580, 1.0
      %v589 = vmul.f32 %v551, 0.5
      %v590 = vmul.f32 %v553, 0.5
      %v591 = vmul.f32 %v557, 0.5
      %v592 = vmul.f32 %v559, 0.5
      %v593 = vmul.f32 %v563, 0.5
      %v594 = vmul.f32 %v565, 0.5
      %v595 = vmul.f32 %v569, 0.5
      %v596 = vmul.f32 %v571, 0.5
      %v597 = vmul.f32 %v589, %v551
      %v598 = vmul.f32 %v590, %v553
      %v599 = vmul.f32 %v591, %v557
      %v600 = vmul.f32 %v592, %v559
      %v601 = vmul.f32 %v593, %v563
      %v602 = vmul.f32 %v594, %v565
      %v603 = vmul.f32 %v595, %v569
      %v604 = vmul.f32 %v596, %v571
      %v605 = vsub.f32 %v573, 0.5
      %v606 = vsub.f32 %v574, 0.5
      %v607 = vsub.f32 %v575, 0.5
      %v608 = vsub.f32 %v576, 0.5
      %v609 = vsub.f32 %v577, 0.5
      %v610 = vsub.f32 %v578, 0.5
      %v611 = vsub.f32 %v579, 0.5
      %v612 = vsub.f32 %v580, 0.5
      %v613 = vsel %vm581, %v597, %v605
      %v614 = vsel %vm582, %v598, %v606
      %v615 = vsel %vm583, %v599, %v607
      %v616 = vsel %vm584, %v600, %v608
      %v617 = vsel %vm585, %v601, %v609
      %v618 = vsel %vm586, %v602, %v610
      %v619 = vsel %vm587, %v603, %v611
      %v620 = vsel %vm588, %v604, %v612
      %v621 = vadd.f32 %v613, %v615
      %v622 = vrot.slane %v621, 4
      %v623 = vadd.f32 %v621, %v622
      %v624 = vrot.slane %v623, 2
      %v625 = vadd.f32 %v623, %v624
      %v626 = vrot.slane %v625, 1
      %v627 = vadd.f32 %v625, %v626
      %v628 = vadd.f32 %v614, %v616
      %v629 = vrot.slane %v628, 4
      %v630 = vadd.f32 %v628, %v629
      %v631 = vrot.slane %v630, 2
      %v632 = vadd.f32 %v630, %v631
      %v633 = vrot.slane %v632, 1
      %v634 = vadd.f32 %v632, %v633
      %v635 = vadd.f32 %v617, %v619
      %v636 = vrot.slane %v635, 4
      %v637 = vadd.f32 %v635, %v636
      %v638 = vrot.slane %v637, 2
      %v639 = vadd.f32 %v637, %v638
      %v640 = vrot.slane %v639, 1
      %v641 = vadd.f32 %v639, %v640
      %v642 = vadd.f32 %v618, %v620
      %v643 = vrot.slane %v642, 4
      %v644 = vadd.f32 %v642, %v643
      %v645 = vrot.slane %v644, 2
      %v646 = vadd.f32 %v644, %v645
      %v647 = vrot.slane %v646, 1
      %v648 = vadd.f32 %v646, %v647
      %v649 = vrot.slane %v358, 1
      %v650 = vrot.slane %v359, 1
      %v653 = vadd.f32 %v358, %v649
      %v654 = vadd.f32 %v359, %v650
      %v655 = vmul.f32 %v653, 0.5
      %v656 = vmul.f32 %v654, 0.5
      %v657 = vmul.f32 %v655, %v627
      %v658 = vmul.f32 %v656, %v634
      %v659 = vmul.f32 %v655, %v641
      %v660 = vmul.f32 %v656, %v648
      %v661 = vrot.slane %v358, 2
      %v662 = vrot.slane %v359, 2
      %v665 = vmul.f32 %v358, %v661
      %v666 = vmul.f32 %v359, %v662
      %v667 = vsub.f32 1.0, %v358
      %v668 = vsub.f32 1.0, %v359
      %v669 = vmul.f32 %v667, %v661
      %v670 = vmul.f32 %v668, %v662
      %v672 = vlaneseq
      %v673 = vshrl.u32 %v672, 7
      %v674 = vsub.s32 0, %v673
      %v675 = vrot.slane %v416, %v674
      %v676 = vlaneseq
      %v677 = vshrl.u32 %v676, 7
      %v678 = vsub.s32 4, %v677
      %v679 = vrot.slane %v416, %v678
      %v682 = vmul.f32 %v669, %v675
      %v683 = vmul.f32 %v670, %v679
      %v686 = vcombine.low %v682, %v683
      %v688 = vunpack.c.l.s4 1966171168
      %v689 = vunpack.c.0.s8 %v688
      %v690 = vlaneseq
      %v691 = vshrl.u32 %v690, 7
      %v692 = vsub.s32 %v689, %v691
      %v693 = vrot.slane %v686, %v692
      %v695 = vunpack.c.l.s4 1966171168
      %v696 = vunpack.c.0.s8 %v695
      %v697 = vlaneseq
      %v698 = vshrl.u32 %v697, 7
      %v699 = vsub.s32 %v696, %v698
      %v700 = vrot.slane %v693, %v699
      %v702 = vlaneseq
      %vm703 = vcmp.ge.s32.totalorder %v702, 0
      %vm704 = vcmp.lt.s32.totalorder %v702, 256
      %vm705 = vmand %vm703, %vm704
      %706 = vst.msk [vmem:[%s344] sm:$0x3] %vm705, %v700
      %v707 = vmul.f32 %v665, %v675
      %v708 = vmul.f32 %v666, %v679
      %v710 = vlaneseq
      %v711 = vshrl.u32 %v710, 7
      %v712 = vsub.s32 2, %v711
      %v713 = vrot.slane %v444, %v712
      %v714 = vlaneseq
      %v715 = vshrl.u32 %v714, 7
      %v716 = vsub.s32 6, %v715
      %v717 = vrot.slane %v444, %v716
      %v720 = vmul.f32 %v665, %v713
      %v721 = vmul.f32 %v666, %v717
      %v722 = vsub.f32 1.0, %v665
      %v723 = vsub.f32 1.0, %v666
      %v724 = vmul.f32 %v722, %v713
      %v725 = vmul.f32 %v723, %v717
      %v726 = vmul.f32 %v665, %v657
      %v727 = vmul.f32 %v666, %v658
      %v728 = vmul.f32 %v665, %v659
      %v729 = vmul.f32 %v666, %v660
      %v732 = vrot.slane %v707, 7
      %v733 = vrot.slane %v708, 7
      %v738 = vrot.slane %v669, 6
      %v739 = vrot.slane %v670, 6
      %v744 = vrot.slane %v720, 5
      %v745 = vrot.slane %v721, 5
      %v750 = vrot.slane %v724, 4
      %v751 = vrot.slane %v725, 4
      %v756 = vrot.slane %v726, 2
      %v757 = vrot.slane %v727, 2
      %v762 = vrot.slane %v728, 1
      %v763 = vrot.slane %v729, 1
      %vm766 = vcmask 1040384
      %v767 = vsel %vm766, %v665, %v732
      %v768 = vsel %vm766, %v666, %v733
      %v769 = vsel %vm477, %v767, %v738
      %v770 = vsel %vm477, %v768, %v739
      %vm771 = vcmask 1042432
      %v772 = vsel %vm771, %v769, %v744
      %v773 = vsel %vm771, %v770, %v745
      %vm774 = vcmask 1043456
      %v775 = vsel %vm774, %v772, %v750
      %v776 = vsel %vm774, %v773, %v751
      %v777 = vsel %vm449, %v775, 1.0
      %v778 = vsel %vm449, %v776, 1.0
      %vm779 = vcmask 1045504
      %v780 = vsel %vm779, %v777, %v756
      %v781 = vsel %vm779, %v778, %v757
      %vm782 = vcmask 1046528
      %v783 = vsel %vm782, %v780, %v762
      %v784 = vsel %vm782, %v781, %v763
      %v785 = vadd.f32 %v783, %v784
      %786 = vadd.xlane.f32.xlu0 %v785
      %v787 = vpop.xlane.xlu0 %786
      %788 = vst [vmem:[%s352] sm:$0xff] %v787
      %s789 = smul.u32 2, %s22
      %p790 = scmp.lt.s32.totalorder %s21, 1
      %s791 = scalar_select %p790, %s21, 1
      %p792 = scmp.lt.s32.totalorder %s789, 1
      %s793 = scalar_select %p792, %s789, 1
      %s794 = smul.addr %s791, 2
      %s795 = sadd.s32 %s793, %s794
      %s796 = scalar_lea.vmem %s4, %s795
      %p797 = scmp.lt.s32.totalorder %s21, 1
      %s798 = scalar_select %p797, %s21, 1
      %p799 = scmp.lt.s32.totalorder %s22, 0
      %s800 = scalar_select %p799, %s22, 0
      %s801 = sadd.s32 %s800, %s798
      %s802 = smul.addr %s801, 8
      %s803 = scalar_lea.vmem %s5, %s802
      // Predicated region
      $region37: #{fce_loss_forward.3} parent=35 // pred_check
        %p804 = pneg %p154
      $region38: #{fce_loss_forward.3} parent=35 // pred_check_branch
        %806 = sbr.rel (%p804) target = $region40
      $region39: #{fce_loss_forward.3} parent=35 // pred_region
        %s807 = smul.u32 2, %s22
      $region40: #{fce_loss_forward.3} parent=35 // pred_fallthru
        _
      // Predicated region
      $region41: #{fce_loss_forward.3} parent=35 // pred_check
        %p808 = pneg %p182
      $region42: #{fce_loss_forward.3} parent=35 // pred_check_branch
        %810 = sbr.rel (%p808) target = $region44
      $region43: #{fce_loss_forward.3} parent=35 // pred_region
        _
      $region44: #{fce_loss_forward.3} parent=35 // pred_fallthru
        _
    $region36: #{fce_loss_forward.3} parent=5 // pred_fallthru
      _
    %p811 = scmp.le.s32.totalorder 2, %s12
    // Predicated region
    $region45: #{fce_loss_forward.3} parent=5 // pred_check
      %p812 = pneg %p811
    $region46: #{fce_loss_forward.3} parent=5 // pred_check_branch
      %814 = sbr.rel (%p812) target = $region48
    $region47: #{fce_loss_forward.3} parent=5 // pred_region
      %s815 = ssub.s32 %s12, 2
      // Predicated region
      $region49: #{fce_loss_forward.3} parent=47 // pred_check
        %p816 = pneg %p160
      $region50: #{fce_loss_forward.3} parent=47 // pred_check_branch
        %818 = sbr.rel (%p816) target = $region52
      $region51: #{fce_loss_forward.3} parent=47 // pred_region
        %s819 = smul.u32 2, %s24
        %p820 = scmp.lt.s32.totalorder %s23, 1
        %s821 = scalar_select %p820, %s23, 1
        %p822 = scmp.lt.s32.totalorder %s819, 1
        %s823 = scalar_select %p822, %s819, 1
        %s824 = smul.addr %s821, 2
        %s825 = sadd.s32 %s823, %s824
        %s826 = scalar_lea.vmem %s4, %s825
      $region52: #{fce_loss_forward.3} parent=47 // pred_fallthru
        _
      // Predicated region
      $region53: #{fce_loss_forward.3} parent=47 // pred_check
        %p827 = pneg %p188
      $region54: #{fce_loss_forward.3} parent=47 // pred_check_branch
        %829 = sbr.rel (%p827) target = $region56
      $region55: #{fce_loss_forward.3} parent=47 // pred_region
        %p830 = scmp.lt.s32.totalorder %s23, 1
        %s831 = scalar_select %p830, %s23, 1
        %p832 = scmp.lt.s32.totalorder %s24, 0
        %s833 = scalar_select %p832, %s24, 0
        %s834 = sadd.s32 %s833, %s831
        %s835 = smul.addr %s834, 8
        %s836 = scalar_lea.vmem %s5, %s835
      $region56: #{fce_loss_forward.3} parent=47 // pred_fallthru
        _
    $region48: #{fce_loss_forward.3} parent=5 // pred_fallthru
      _
  $region6: #{fce_loss_forward.3} parent=0 // loop_footer
    %s16 = sadd.s32 1, %s12
  $region7: #{fce_loss_forward.3} parent=0 // loop_footer_branch
    %11 = sbr.rel target = $region3
  $region8: #{fce_loss_forward.3} parent=0 // loop_exit
    _

// kernel: fce_loss_forward.5
$region0: #{fce_loss_forward.5}
  #allocation0 [shape = 'u32[]', space=smem, size = 0x4, offset = 0x4, fixed_abs, tag = 'smem constant byte address 0x4 - core index']
  #allocation1 [shape = 'u32[144,128]{1,0:T(1,128)}', space=vmem, size = 0x12000, scoped, tag = 'internal scratch']
  %s0 = inlined_call_operand.vmem [shape: f32[2,4,16], index: 0, kind: input, shape index: {}]
  %s1 = inlined_call_operand.vmem [shape: f32[2,10,16], index: 1, kind: input, shape index: {}]
  %s2 = inlined_call_operand.vmem [shape: f32[2,13,16], index: 2, kind: input, shape index: {}]
  %s3 = inlined_call_operand.vmem [shape: f32[32,10], index: 3, kind: input, shape index: {}]
  %s4 = inlined_call_operand.vmem [shape: f32[2,1,16], index: 4, kind: output, shape index: {0}]
  %s5 = inlined_call_operand.vmem [shape: f32[2,1,8,128], index: 5, kind: output, shape index: {1}]
  %6 = xla_tuple %s4, %s5
  %s7 = sld [smem:[#allocation0]]
  $region57: #{fce_loss_forward.5} parent=0
    _
  %s9 = ssub.s32 1, %s7
  %s10 = scalar_select 0, %s9, %s7
  loop: start=0, step=1, limit=4
  $region2: #{fce_loss_forward.5} parent=0 // loop_pre_header
    _
  $region3: #{fce_loss_forward.5} parent=0 // loop_header
    %s12 = sphi 0, %s16
    %p13 = scmp.ge.s32.totalorder %s12, 4
    %s19 = sphi 0, %s31
    %s20 = sphi 0, %s27
    %s21 = sphi 0, %s19
    %s22 = sphi 0, %s20
    %s23 = sphi 0, %s21
    %s24 = sphi 0, %s22
    %s36 = sphi 0, %s38
    %s39 = sphi 0, %s36
    %s40 = sphi 0, %s39
    %s56 = sphi 0, %s40
    %s64 = sphi 0, %s66
    %s67 = sphi 0, %s64
    %s68 = sphi 0, %s67
    %s84 = sphi 0, %s68
    %s92 = sphi 0, %s94
    %s95 = sphi 0, %s92
    %s96 = sphi 0, %s95
    %s112 = sphi 0, %s96
    %s116 = sphi 0, %s116
    %s118 = sphi 0, %s116
    %s119 = sphi 0, %s118
    %s133 = sphi 0, %s119
    %s141 = sphi 0, %s143
    %s144 = sphi 0, %s141
    %s145 = sphi 0, %s144
    %s161 = sphi 0, %s145
    %s169 = sphi 0, %s171
    %s172 = sphi 0, %s169
    %s173 = sphi 0, %s172
    %s189 = sphi 0, %s173
  $region4: #{fce_loss_forward.5} parent=0 // loop_header_branch
    %15 = sbr.rel (%p13) target = $region8
  $region5: #{fce_loss_forward.5} parent=0 // loop_body
    %s17 = ssub.s32 %s12, 1
    %s18 = ssub.s32 %s12, 2
    %s25 = sadd.s32 1, %s20
    %p26 = scmp.ge.s32.totalorder %s25, 1
    %s27 = scalar_select %p26, 0, %s25
    %s28 = sadd.s32 1, %s19
    %s29 = scalar_select %p26, %s28, %s19
    %p30 = scmp.ge.s32.totalorder %s29, 2
    %s31 = scalar_select %p30, 0, %s29
    %s32 = ssub.s32 %s19, %s31
    %s33 = ssub.s32 %s20, %s27
    %s34 = sor.u32 %s32, %s33
    %p35 = scmp.eq.s32.totalorder %s34, 0
    %s37 = sadd.s32 %s36, 1
    %s38 = scalar_select %p35, %s36, %s37
    %p41 = pneg %p35
    %p42 = scmp.eq.s32.totalorder %s12, 1
    %p43 = por %p41, %p42
    %p44 = scmp.ne.s32.totalorder %s36, %s39
    %p45 = scmp.eq.s32.totalorder %s12, 0
    %p46 = por %p44, %p45
    %p47 = scmp.ne.s32.totalorder %s36, %s39
    %p48 = scmp.eq.s32.totalorder %s17, 1
    %p49 = por %p47, %p48
    %p50 = scmp.ne.s32.totalorder %s39, %s40
    %p51 = scmp.eq.s32.totalorder %s17, 0
    %p52 = por %p50, %p51
    %p53 = scmp.ne.s32.totalorder %s39, %s40
    %p54 = scmp.eq.s32.totalorder %s18, 1
    %p55 = por %p53, %p54
    %p57 = scmp.ne.s32.totalorder %s40, %s56
    %p58 = scmp.eq.s32.totalorder %s18, 0
    %p59 = por %p57, %p58
    %s60 = ssub.s32 %s19, %s31
    %s61 = ssub.s32 %s20, %s27
    %s62 = sor.u32 %s60, %s61
    %p63 = scmp.eq.s32.totalorder %s62, 0
    %s65 = sadd.s32 %s64, 1
    %s66 = scalar_select %p63, %s64, %s65
    %p69 = pneg %p63
    %p70 = scmp.eq.s32.totalorder %s12, 1
    %p71 = por %p69, %p70
    %p72 = scmp.ne.s32.totalorder %s64, %s67
    %p73 = scmp.eq.s32.totalorder %s12, 0
    %p74 = por %p72, %p73
    %p75 = scmp.ne.s32.totalorder %s64, %s67
    %p76 = scmp.eq.s32.totalorder %s17, 1
    %p77 = por %p75, %p76
    %p78 = scmp.ne.s32.totalorder %s67, %s68
    %p79 = scmp.eq.s32.totalorder %s17, 0
    %p80 = por %p78, %p79
    %p81 = scmp.ne.s32.totalorder %s67, %s68
    %p82 = scmp.eq.s32.totalorder %s18, 1
    %p83 = por %p81, %p82
    %p85 = scmp.ne.s32.totalorder %s68, %s84
    %p86 = scmp.eq.s32.totalorder %s18, 0
    %p87 = por %p85, %p86
    %s88 = ssub.s32 %s19, %s31
    %s89 = ssub.s32 %s20, %s27
    %s90 = sor.u32 %s88, %s89
    %p91 = scmp.eq.s32.totalorder %s90, 0
    %s93 = sadd.s32 %s92, 1
    %s94 = scalar_select %p91, %s92, %s93
    %p97 = pneg %p91
    %p98 = scmp.eq.s32.totalorder %s12, 1
    %p99 = por %p97, %p98
    %p100 = scmp.ne.s32.totalorder %s92, %s95
    %p101 = scmp.eq.s32.totalorder %s12, 0
    %p102 = por %p100, %p101
    %p103 = scmp.ne.s32.totalorder %s92, %s95
    %p104 = scmp.eq.s32.totalorder %s17, 1
    %p105 = por %p103, %p104
    %p106 = scmp.ne.s32.totalorder %s95, %s96
    %p107 = scmp.eq.s32.totalorder %s17, 0
    %p108 = por %p106, %p107
    %p109 = scmp.ne.s32.totalorder %s95, %s96
    %p110 = scmp.eq.s32.totalorder %s18, 1
    %p111 = por %p109, %p110
    %p113 = scmp.ne.s32.totalorder %s96, %s112
    %p114 = scmp.eq.s32.totalorder %s18, 0
    %p115 = por %p113, %p114
    %s117 = sadd.s32 %s116, 1
    %p120 = scmp.eq.s32.totalorder %s12, 1
    %p121 = scmp.ne.s32.totalorder %s116, %s118
    %p122 = scmp.eq.s32.totalorder %s12, 0
    %p123 = por %p121, %p122
    %p124 = scmp.ne.s32.totalorder %s116, %s118
    %p125 = scmp.eq.s32.totalorder %s17, 1
    %p126 = por %p124, %p125
    %p127 = scmp.ne.s32.totalorder %s118, %s119
    %p128 = scmp.eq.s32.totalorder %s17, 0
    %p129 = por %p127, %p128
    %p130 = scmp.ne.s32.totalorder %s118, %s119
    %p131 = scmp.eq.s32.totalorder %s18, 1
    %p132 = por %p130, %p131
    %p134 = scmp.ne.s32.totalorder %s119, %s133
    %p135 = scmp.eq.s32.totalorder %s18, 0
    %p136 = por %p134, %p135
    %s137 = ssub.s32 %s19, %s31
    %s138 = ssub.s32 %s20, %s27
    %s139 = sor.u32 %s137, %s138
    %p140 = scmp.eq.s32.totalorder %s139, 0
    %s142 = sadd.s32 %s141, 1
    %s143 = scalar_select %p140, %s141, %s142
    %p146 = pneg %p140
    %p147 = scmp.eq.s32.totalorder %s12, 1
    %p148 = por %p146, %p147
    %p149 = scmp.ne.s32.totalorder %s141, %s144
    %p150 = scmp.eq.s32.totalorder %s12, 0
    %p151 = por %p149, %p150
    %p152 = scmp.ne.s32.totalorder %s141, %s144
    %p153 = scmp.eq.s32.totalorder %s17, 1
    %p154 = por %p152, %p153
    %p155 = scmp.ne.s32.totalorder %s144, %s145
    %p156 = scmp.eq.s32.totalorder %s17, 0
    %p157 = por %p155, %p156
    %p158 = scmp.ne.s32.totalorder %s144, %s145
    %p159 = scmp.eq.s32.totalorder %s18, 1
    %p160 = por %p158, %p159
    %p162 = scmp.ne.s32.totalorder %s145, %s161
    %p163 = scmp.eq.s32.totalorder %s18, 0
    %p164 = por %p162, %p163
    %s165 = ssub.s32 %s19, %s31
    %s166 = ssub.s32 %s20, %s27
    %s167 = sor.u32 %s165, %s166
    %p168 = scmp.eq.s32.totalorder %s167, 0
    %s170 = sadd.s32 %s169, 1
    %s171 = scalar_select %p168, %s169, %s170
    %p174 = pneg %p168
    %p175 = scmp.eq.s32.totalorder %s12, 1
    %p176 = por %p174, %p175
    %p177 = scmp.ne.s32.totalorder %s169, %s172
    %p178 = scmp.eq.s32.totalorder %s12, 0
    %p179 = por %p177, %p178
    %p180 = scmp.ne.s32.totalorder %s169, %s172
    %p181 = scmp.eq.s32.totalorder %s17, 1
    %p182 = por %p180, %p181
    %p183 = scmp.ne.s32.totalorder %s172, %s173
    %p184 = scmp.eq.s32.totalorder %s17, 0
    %p185 = por %p183, %p184
    %p186 = scmp.ne.s32.totalorder %s172, %s173
    %p187 = scmp.eq.s32.totalorder %s18, 1
    %p188 = por %p186, %p187
    %p190 = scmp.ne.s32.totalorder %s173, %s189
    %p191 = scmp.eq.s32.totalorder %s18, 0
    %p192 = por %p190, %p191
    %p193 = scmp.le.s32.totalorder 1, %s12
    %p194 = scmp.lt.s32.totalorder %s12, 3
    %p195 = pnand %p193, %p194
    %p196 = pneg %p195
    // Predicated region
    $region9: #{fce_loss_forward.5} parent=5 // pred_check
      _
    $region10: #{fce_loss_forward.5} parent=5 // pred_check_branch
      %198 = sbr.rel (%p195) target = $region12
    $region11: #{fce_loss_forward.5} parent=5 // pred_region
      %s199 = ssub.s32 %s12, 1
      // Predicated region
      $region13: #{fce_loss_forward.5} parent=11 // pred_check
        %p200 = pneg %p129
      $region14: #{fce_loss_forward.5} parent=11 // pred_check_branch
        %202 = sbr.rel (%p200) target = $region16
      $region15: #{fce_loss_forward.5} parent=11 // pred_region
        _
      $region16: #{fce_loss_forward.5} parent=11 // pred_fallthru
        _
    $region12: #{fce_loss_forward.5} parent=5 // pred_fallthru
      _
    %p203 = scmp.lt.s32.totalorder %s12, 2
    // Predicated region
    $region17: #{fce_loss_forward.5} parent=5 // pred_check
      %p204 = pneg %p203
    $region18: #{fce_loss_forward.5} parent=5 // pred_check_branch
      %206 = sbr.rel (%p204) target = $region20
    $region19: #{fce_loss_forward.5} parent=5 // pred_region
      // Predicated region
      $region21: #{fce_loss_forward.5} parent=19 // pred_check
        %p207 = pneg %p46
      $region22: #{fce_loss_forward.5} parent=19 // pred_check_branch
        %209 = sbr.rel (%p207) target = $region24
      $region23: #{fce_loss_forward.5} parent=19 // pred_region
        %p210 = scmp.lt.s32.totalorder %s19, 1
        %s211 = scalar_select %p210, %s19, 1
        %p212 = scmp.lt.s32.totalorder %s20, 0
        %s213 = scalar_select %p212, %s20, 0
        %s214 = sadd.s32 %s213, %s211
        %s215 = smul.addr %s214, 4
        %s216 = scalar_lea.vmem %s0, %s215
      $region24: #{fce_loss_forward.5} parent=19 // pred_fallthru
        _
      // Predicated region
      $region25: #{fce_loss_forward.5} parent=19 // pred_check
        %p217 = pneg %p74
      $region26: #{fce_loss_forward.5} parent=19 // pred_check_branch
        %219 = sbr.rel (%p217) target = $region28
      $region27: #{fce_loss_forward.5} parent=19 // pred_region
        %p220 = scmp.lt.s32.totalorder %s19, 1
        %s221 = scalar_select %p220, %s19, 1
        %p222 = scmp.lt.s32.totalorder %s20, 0
        %s223 = scalar_select %p222, %s20, 0
        %s224 = smul.addr %s221, 2
        %s225 = sadd.s32 %s223, %s224
        %s226 = smul.addr %s225, 8
        %s227 = scalar_lea.vmem %s1, %s226
      $region28: #{fce_loss_forward.5} parent=19 // pred_fallthru
        _
      // Predicated region
      $region29: #{fce_loss_forward.5} parent=19 // pred_check
        %p228 = pneg %p102
      $region30: #{fce_loss_forward.5} parent=19 // pred_check_branch
        %230 = sbr.rel (%p228) target = $region32
      $region31: #{fce_loss_forward.5} parent=19 // pred_region
        %p231 = scmp.lt.s32.totalorder %s19, 1
        %s232 = scalar_select %p231, %s19, 1
        %p233 = scmp.lt.s32.totalorder %s20, 0
        %s234 = scalar_select %p233, %s20, 0
        %s235 = smul.addr %s232, 2
        %s236 = sadd.s32 %s234, %s235
        %s237 = smul.addr %s236, 8
        %s238 = scalar_lea.vmem %s2, %s237
      $region32: #{fce_loss_forward.5} parent=19 // pred_fallthru
        _
    $region20: #{fce_loss_forward.5} parent=5 // pred_fallthru
      _
    %p239 = scmp.le.s32.totalorder 1, %s12
    %p240 = scmp.lt.s32.totalorder %s12, 3
    %p241 = pnand %p239, %p240
    %p242 = pneg %p241
    // Predicated region
    $region33: #{fce_loss_forward.5} parent=5 // pred_check
      _
    $region34: #{fce_loss_forward.5} parent=5 // pred_check_branch
      %244 = sbr.rel (%p241) target = $region36
    $region35: #{fce_loss_forward.5} parent=5 // pred_region
      %s245 = ssub.s32 %s12, 1
      %p246 = scmp.lt.s32.totalorder %s21, 1
      %s247 = scalar_select %p246, %s21, 1
      %p248 = scmp.lt.s32.totalorder %s22, 0
      %s249 = scalar_select %p248, %s22, 0
      %s250 = sadd.s32 %s249, %s247
      %s251 = smul.addr %s250, 4
      %s252 = scalar_lea.vmem %s0, %s251
      %p253 = pneg %p52
      %p254 = pneg %p49
      %p255 = scmp.lt.s32.totalorder %s21, 1
      %s256 = scalar_select %p255, %s21, 1
      %p257 = scmp.lt.s32.totalorder %s22, 0
      %s258 = scalar_select %p257, %s22, 0
      %s259 = smul.addr %s256, 2
      %s260 = sadd.s32 %s258, %s259
      %s261 = smul.addr %s260, 8
      %s262 = scalar_lea.vmem %s1, %s261
      %p263 = pneg %p80
      %p264 = pneg %p77
      %p265 = scmp.lt.s32.totalorder %s21, 1
      %s266 = scalar_select %p265, %s21, 1
      %p267 = scmp.lt.s32.totalorder %s22, 0
      %s268 = scalar_select %p267, %s22, 0
      %s269 = smul.addr %s266, 2
      %s270 = sadd.s32 %s268, %s269
      %s271 = smul.addr %s270, 8
      %s272 = scalar_lea.vmem %s2, %s271
      %p273 = pneg %p108
      %p274 = pneg %p105
      %p275 = pneg %p129
      %p276 = pneg %p126
      %p277 = pneg %p157
      %p278 = pneg %p154
      %p279 = scmp.lt.s32.totalorder %s21, 1
      %s280 = scalar_select %p279, %s21, 1
      %p281 = scmp.lt.s32.totalorder %s22, 0
      %s282 = scalar_select %p281, %s22, 0
      %s283 = sadd.s32 %s282, %s280
      %s284 = scalar_lea.vmem %s4, %s283
      %p285 = pneg %p185
      %p286 = pneg %p182
      %p287 = scmp.lt.s32.totalorder %s21, 1
      %s288 = scalar_select %p287, %s21, 1
      %p289 = scmp.lt.s32.totalorder %s22, 0
      %s290 = scalar_select %p289, %s22, 0
      %s291 = sadd.s32 %s290, %s288
      %s292 = smul.addr %s291, 8
      %s293 = scalar_lea.vmem %s5, %s292
      %p294 = scmp.lt.s32.totalorder %s21, 1
      %s295 = scalar_select %p294, %s21, 1
      %p296 = scmp.lt.s32.totalorder %s22, 0
      %s297 = scalar_select %p296, %s22, 0
      %s298 = sadd.s32 %s297, %s295
      %s299 = smul.addr %s298, 4
      %s300 = scalar_lea.vmem %s0, %s299
      %p301 = scmp.lt.s32.totalorder %s21, 1
      %s302 = scalar_select %p301, %s21, 1
      %p303 = scmp.lt.s32.totalorder %s22, 0
      %s304 = scalar_select %p303, %s22, 0
      %s305 = smul.addr %s302, 2
      %s306 = sadd.s32 %s304, %s305
      %s307 = smul.addr %s306, 8
      %s308 = scalar_lea.vmem %s1, %s307
      %p309 = scmp.lt.s32.totalorder %s21, 1
      %s310 = scalar_select %p309, %s21, 1
      %p311 = scmp.lt.s32.totalorder %s22, 0
      %s312 = scalar_select %p311, %s22, 0
      %s313 = smul.addr %s310, 2
      %s314 = sadd.s32 %s312, %s313
      %s315 = smul.addr %s314, 8
      %s316 = scalar_lea.vmem %s2, %s315
      %p317 = scmp.lt.s32.totalorder %s21, 1
      %s318 = scalar_select %p317, %s21, 1
      %p319 = scmp.lt.s32.totalorder %s22, 0
      %s320 = scalar_select %p319, %s22, 0
      %s321 = sadd.s32 %s320, %s318
      %s322 = scalar_lea.vmem %s4, %s321
      %p323 = scmp.lt.s32.totalorder %s21, 1
      %s324 = scalar_select %p323, %s21, 1
      %p325 = scmp.lt.s32.totalorder %s22, 0
      %s326 = scalar_select %p325, %s22, 0
      %s327 = sadd.s32 %s326, %s324
      %s328 = smul.addr %s327, 8
      %s329 = scalar_lea.vmem %s5, %s328
      %v330 = vld [vmem:[%s300] sm:$0xf]
      %v331 = vld [vmem:[%s308] sm:$0xff]
      %v332 = vld [vmem:[%s308 + $0x8] sm:$0x3]
      %v333 = vld [vmem:[%s316] sm:$0xff]
      %v334 = vld [vmem:[%s316 + $0x8] sm:$0x1f]
      %v335 = vld [vmem:[%s3] sm:$0xff]
      %v336 = vld [vmem:[%s3 + $0x8] sm:$0xff]
      %v337 = vld [vmem:[%s3 + $0x10] sm:$0xff]
      %v338 = vld [vmem:[%s3 + $0x18] sm:$0xff]
      %v340 = vrot.slane %v330, 1
      %v342 = vmax.f32 %v330, %v340
      %v343 = vsub.f32 %v330, %v342
      %v344 = vmul.f32 %v343, 1.442695
      %v345 = vpow.pop %v344
      %v347 = vrot.slane %v342, 7
      %v349 = vsub.f32 %v330, %v347
      %v350 = vmul.f32 %v349, 1.442695
      %v351 = vpow.pop %v350
      %v353 = vrot.slane %v351, 1
      %v355 = vadd.f32 %v345, %v353
      %v356 = vlog2.pop %v355
      %v357 = vmul.f32 %v356, 0.6931472
      %v358 = vadd.f32 %v342, %v357
      %vm359 = vcmp.gt.f32.partialorder %v333, 0.5
      %v360 = vsel %vm359, %v340, %v330
      %v361 = vsub.f32 %v358, %v360
      %v362 = vrot.slane %v330, 2
      %v364 = vsel %vm359, %v362, %v340
      %v366 = vrot.slane %v364, 7
      %v368 = vsub.f32 %v358, %v366
      %vm371 = vcmask 1044480
      %v372 = vrot.slane %v333, 3
      %v373 = vrot.slane %v334, 3
      %v374 = vsel %vm371, %v372, %v373
      %v377 = vsub.f32 %v331, %v374
      %v378 = vsub.f32 %v332, %v373
      %vm379 = vcmask 80896
      %v381 = vsel %vm379, %v335, 0
      %v384 = vsel %vm379, %v336, 0
      %v387 = vsel %vm379, %v337, 0
      %v390 = vsel %vm379, %v338, 0
      %vm392 = vcmask 1041408
      %v394 = vsel %vm392, %v378, 0
      %396 = vmatprep.subr.mxu0 0.0
      %397 = vmatpush1.msra.mxu0 %v377
      %398 = vmatprep.subr.mxu0 0.0
      %399 = vmatpush1.msra.mxu0 %v394
      %400 = vmatprep.subr.mxu0 0.0
      %401 = vmatpush1.msra.mxu0 0.0
      %402 = vmatprep.subr.mxu0 0.0
      %403 = vmatpush1.msra.mxu0 0.0
      %404 = vmatprep.subr.mxu0 0.0
      %405 = vmatpush1.msra.mxu0 0.0
      %406 = vmatprep.subr.mxu0 0.0
      %407 = vmatpush1.msra.mxu0 0.0
      %408 = vmatprep.subr.mxu0 0.0
      %409 = vmatpush1.msra.mxu0 0.0
      %410 = vmatprep.subr.mxu0 0.0
      %411 = vmatpush1.msra.mxu0 0.0
      %412 = vmatprep.subr.mxu0 0.0
      %413 = vmatpush1.msra.mxu0 0.0
      %414 = vmatprep.subr.mxu0 0.0
      %415 = vmatpush1.msra.mxu0 0.0
      %416 = vmatprep.subr.mxu0 0.0
      %417 = vmatpush1.msra.mxu0 0.0
      %418 = vmatprep.subr.mxu0 0.0
      %419 = vmatpush1.msra.mxu0 0.0
      %420 = vmatprep.subr.mxu0 0.0
      %421 = vmatpush1.msra.mxu0 0.0
      %422 = vmatprep.subr.mxu0 0.0
      %423 = vmatpush1.msra.mxu0 0.0
      %424 = vmatprep.subr.mxu0 0.0
      %425 = vmatpush1.msra.mxu0 0.0
      %426 = vmatprep.subr.mxu0 0.0
      %427 = vmatpush1.msra.mxu0 0.0
      %428 = vmatprep.subr.mxu0 0.0
      %429 = vmatpush1.msra.mxu0 0.0
      %430 = vmatprep.subr.mxu0 0.0
      %431 = vmatpush1.msra.mxu0 0.0
      %432 = vmatprep.subr.mxu0 0.0
      %433 = vmatpush1.msra.mxu0 0.0
      %434 = vmatprep.subr.mxu0 0.0
      %435 = vmatpush1.msra.mxu0 0.0
      %436 = vmatprep.subr.mxu0 0.0
      %437 = vmatpush1.msra.mxu0 0.0
      %438 = vmatprep.subr.mxu0 0.0
      %439 = vmatpush1.msra.mxu0 0.0
      %440 = vmatprep.subr.mxu0 0.0
      %441 = vmatpush1.msra.mxu0 0.0
      %442 = vmatprep.subr.mxu0 0.0
      %443 = vmatpush1.msra.mxu0 0.0
      %444 = vmatprep.subr.mxu0 0.0
      %445 = vmatpush1.msra.mxu0 0.0
      %446 = vmatprep.subr.mxu0 0.0
      %447 = vmatpush1.msra.mxu0 0.0
      %448 = vmatprep.subr.mxu0 0.0
      %449 = vmatpush1.msra.mxu0 0.0
      %450 = vmatprep.subr.mxu0 0.0
      %451 = vmatpush1.msra.mxu0 0.0
      %452 = vmatprep.subr.mxu0 0.0
      %453 = vmatpush1.msra.mxu0 0.0
      %454 = vmatprep.subr.mxu0 0.0
      %455 = vmatpush1.msra.mxu0 0.0
      %456 = vmatprep.subr.mxu0 0.0
      %457 = vmatpush1.msra.mxu0 0.0
      %458 = vmatprep.subr.mxu0 0.0
      %459 = vmatpush1.msra.mxu0 0.0
      %460 = vmatprep.mubr.f32.mxu0 0.0
      %461 = vmatmul.mubr.f32.gmra.mrb[0].mxu0 %v381
      %v462 = vpop.f32.mrb[0].mxu0
      %v463 = vadd.f32 0.0, %v462
      %v464 = vpop.f32.mrb[0].mxu0
      %465 = vmatprep.mubr.f32.mxu0 0.0
      %466 = vmatmul.mubr.f32.gmra.mrb[0].mxu0 %v384
      %v467 = vpop.f32.mrb[0].mxu0
      %v468 = vadd.f32 0.0, %v467
      %v469 = vpop.f32.mrb[0].mxu0
      %470 = vmatprep.mubr.f32.mxu0 0.0
      %471 = vmatmul.mubr.f32.gmra.mrb[0].mxu0 %v387
      %v472 = vpop.f32.mrb[0].mxu0
      %v473 = vadd.f32 0.0, %v472
      %v474 = vpop.f32.mrb[0].mxu0
      %475 = vmatprep.mubr.f32.mxu0 0.0
      %476 = vmatmul.mubr.f32.gmra.mrb[0].mxu0 %v390
      %v477 = vpop.f32.mrb[0].mxu0
      %v478 = vadd.f32 0.0, %v477
      %v479 = vpop.f32.mrb[0].mxu0
      %480 = vdwg.mxu0
      %v481 = vand.u32 2147483647, %v463
      %v482 = vand.u32 2147483647, %v468
      %v483 = vand.u32 2147483647, %v473
      %v484 = vand.u32 2147483647, %v478
      %vm485 = vcmp.lt.f32.partialorder %v481, 1.0
      %vm486 = vcmp.lt.f32.partialorder %v482, 1.0
      %vm487 = vcmp.lt.f32.partialorder %v483, 1.0
      %vm488 = vcmp.lt.f32.partialorder %v484, 1.0
      %v489 = vmul.f32 %v463, 0.5
      %v490 = vmul.f32 %v468, 0.5
      %v491 = vmul.f32 %v473, 0.5
      %v492 = vmul.f32 %v478, 0.5
      %v493 = vmul.f32 %v489, %v463
      %v494 = vmul.f32 %v490, %v468
      %v495 = vmul.f32 %v491, %v473
      %v496 = vmul.f32 %v492, %v478
      %v497 = vsub.f32 %v481, 0.5
      %v498 = vsub.f32 %v482, 0.5
      %v499 = vsub.f32 %v483, 0.5
      %v500 = vsub.f32 %v484, 0.5
      %v501 = vsel %vm485, %v493, %v497
      %v502 = vsel %vm486, %v494, %v498
      %v503 = vsel %vm487, %v495, %v499
      %v504 = vsel %vm488, %v496, %v500
      %vm505 = vcmask 130048
      %v506 = vsel %vm505, %v501, 0.0
      %v507 = vsel %vm505, %v502, 0.0
      %v508 = vadd.f32 %v506, %v507
      %v509 = vrot.slane %v508, 4
      %v510 = vadd.f32 %v508, %v509
      %v511 = vrot.slane %v510, 2
      %v512 = vadd.f32 %v510, %v511
      %v513 = vrot.slane %v512, 1
      %v514 = vadd.f32 %v512, %v513
      %v515 = vsel %vm505, %v503, 0.0
      %v516 = vsel %vm505, %v504, 0.0
      %v517 = vadd.f32 %v515, %v516
      %v518 = vrot.slane %v517, 4
      %v519 = vadd.f32 %v517, %v518
      %v520 = vrot.slane %v519, 2
      %v521 = vadd.f32 %v519, %v520
      %v522 = vrot.slane %v521, 1
      %v523 = vadd.f32 %v521, %v522
      %v524 = vrot.slane %v333, 1
      %v526 = vadd.f32 %v333, %v524
      %v527 = vmul.f32 %v526, 0.5
      %v528 = vmul.f32 %v527, %v514
      %v529 = vmul.f32 %v527, %v523
      %v530 = vrot.slane %v333, 2
      %v532 = vmul.f32 %v333, %v530
      %v533 = vsub.f32 1.0, %v333
      %v534 = vmul.f32 %v533, %v530
      %v535 = vmul.f32 %v534, %v361
      %vm536 = vcmask 122880
      %537 = vst.msk [vmem:[%s322] sm:$0x1] %vm536, %v535
      %v538 = vmul.f32 %v532, %v361
      %v540 = vrot.slane %v368, 2
      %v542 = vmul.f32 %v532, %v540
      %v543 = vsub.f32 1.0, %v532
      %v544 = vmul.f32 %v543, %v540
      %v545 = vmul.f32 %v532, %v528
      %v546 = vmul.f32 %v532, %v529
      %v548 = vrot.slane %v538, 7
      %v551 = vrot.slane %v534, 6
      %v554 = vrot.slane %v542, 5
      %v557 = vrot.slane %v544, 4
      %v560 = vrot.slane %v545, 2
      %v563 = vrot.slane %v546, 1
      %vm565 = vcmask 1040384
      %v566 = vsel %vm565, %v532, %v548
      %v567 = vsel %vm392, %v566, %v551
      %vm568 = vcmask 1042432
      %v569 = vsel %vm568, %v567, %v554
      %vm570 = vcmask 1043456
      %v571 = vsel %vm570, %v569, %v557
      %v572 = vsel %vm371, %v571, 1.0
      %vm573 = vcmask 1045504
      %v574 = vsel %vm573, %v572, %v560
      %vm575 = vcmask 1046528
      %v576 = vsel %vm575, %v574, %v563
      %v577 = vsel %vm505, %v576, 0.0
      %578 = vadd.xlane.f32.xlu0 %v577
      %v579 = vpop.xlane.xlu0 %578
      %580 = vst [vmem:[%s329] sm:$0xff] %v579
      %p581 = scmp.lt.s32.totalorder %s21, 1
      %s582 = scalar_select %p581, %s21, 1
      %p583 = scmp.lt.s32.totalorder %s22, 0
      %s584 = scalar_select %p583, %s22, 0
      %s585 = sadd.s32 %s584, %s582
      %s586 = scalar_lea.vmem %s4, %s585
      %p587 = scmp.lt.s32.totalorder %s21, 1
      %s588 = scalar_select %p587, %s21, 1
      %p589 = scmp.lt.s32.totalorder %s22, 0
      %s590 = scalar_select %p589, %s22, 0
      %s591 = sadd.s32 %s590, %s588
      %s592 = smul.addr %s591, 8
      %s593 = scalar_lea.vmem %s5, %s592
      // Predicated region
      $region37: #{fce_loss_forward.5} parent=35 // pred_check
        %p594 = pneg %p154
      $region38: #{fce_loss_forward.5} parent=35 // pred_check_branch
        %596 = sbr.rel (%p594) target = $region40
      $region39: #{fce_loss_forward.5} parent=35 // pred_region
        _
      $region40: #{fce_loss_forward.5} parent=35 // pred_fallthru
        _
      // Predicated region
      $region41: #{fce_loss_forward.5} parent=35 // pred_check
        %p597 = pneg %p182
      $region42: #{fce_loss_forward.5} parent=35 // pred_check_branch
        %599 = sbr.rel (%p597) target = $region44
      $region43: #{fce_loss_forward.5} parent=35 // pred_region
        _
      $region44: #{fce_loss_forward.5} parent=35 // pred_fallthru
        _
    $region36: #{fce_loss_forward.5} parent=5 // pred_fallthru
      _
    %p600 = scmp.le.s32.totalorder 2, %s12
    // Predicated region
    $region45: #{fce_loss_forward.5} parent=5 // pred_check
      %p601 = pneg %p600
    $region46: #{fce_loss_forward.5} parent=5 // pred_check_branch
      %603 = sbr.rel (%p601) target = $region48
    $region47: #{fce_loss_forward.5} parent=5 // pred_region
      %s604 = ssub.s32 %s12, 2
      // Predicated region
      $region49: #{fce_loss_forward.5} parent=47 // pred_check
        %p605 = pneg %p160
      $region50: #{fce_loss_forward.5} parent=47 // pred_check_branch
        %607 = sbr.rel (%p605) target = $region52
      $region51: #{fce_loss_forward.5} parent=47 // pred_region
        %p608 = scmp.lt.s32.totalorder %s23, 1
        %s609 = scalar_select %p608, %s23, 1
        %p610 = scmp.lt.s32.totalorder %s24, 0
        %s611 = scalar_select %p610, %s24, 0
        %s612 = sadd.s32 %s611, %s609
        %s613 = scalar_lea.vmem %s4, %s612
      $region52: #{fce_loss_forward.5} parent=47 // pred_fallthru
        _
      // Predicated region
      $region53: #{fce_loss_forward.5} parent=47 // pred_check
        %p614 = pneg %p188
      $region54: #{fce_loss_forward.5} parent=47 // pred_check_branch
        %616 = sbr.rel (%p614) target = $region56
      $region55: #{fce_loss_forward.5} parent=47 // pred_region
        %p617 = scmp.lt.s32.totalorder %s23, 1
        %s618 = scalar_select %p617, %s23, 1
        %p619 = scmp.lt.s32.totalorder %s24, 0
        %s620 = scalar_select %p619, %s24, 0
        %s621 = sadd.s32 %s620, %s618
        %s622 = smul.addr %s621, 8
        %s623 = scalar_lea.vmem %s5, %s622
      $region56: #{fce_loss_forward.5} parent=47 // pred_fallthru
        _
    $region48: #{fce_loss_forward.5} parent=5 // pred_fallthru
      _
  $region6: #{fce_loss_forward.5} parent=0 // loop_footer
    %s16 = sadd.s32 1, %s12
  $region7: #{fce_loss_forward.5} parent=0 // loop_footer_branch
    %11 = sbr.rel target = $region3
  $region8: #{fce_loss_forward.5} parent=0 // loop_exit
    _

</llo_original>
